<compile_context>
chip_gen: v7x
topology: tpu7x:2x2x1
jax: 0.10.0
libtpu: 0.0.40
codegen_flags: <defaults>
</compile_context>

<pallas_src>
import math

import jax
import jax.numpy as jnp
from jax.experimental import pallas as pl
from jax.experimental.pallas import tpu as pltpu

BN_EPS = 1e-5
LANE = 128


def _projection_head_kernel(x_ref, wa_ref, ba_ref, w1_ref, bnp_ref,
                            w2_ref, b2_ref, o_ref):
    """One grid step == Gs independent, full (B, T, D) batches stacked together."""
    Gs, B, T, D = x_ref.shape
    H = w1_ref.shape[1]
    N = Gs * B

    # Leading-dim merge (layout-preserving): all Gs*B rows share the matmuls.
    x = x_ref[...].reshape(N, T, D)                  # (N, T, D) f32
    wa = wa_ref[0, :]                                # (D,)

    # ---- temporal attention: Linear(D, 1) + softmax over time ----
    # N=1 projection kept off the MXU: VPU multiply + XLU lane reduce.
    # (The scalar bias ba is a softmax no-op mathematically; kept for fidelity.)
    scores = jnp.sum(x * wa, axis=-1) + ba_ref[0, 0]           # (N, T)
    m = jnp.max(scores, axis=-1, keepdims=True)
    e = jnp.exp(scores - m)
    denom = jnp.sum(e, axis=-1, keepdims=True)
    # approx=False: exact reciprocal so the 1e-4 check is safe (EUP either way).
    attn = e * pl.reciprocal(denom, approx=False)              # (N, T)

    # ---- attention pooling over time, as a contraction (no attn relayout) ----
    pooled = jnp.einsum('nqt,ntd->nqd', attn[:, None, :], x,
                        preferred_element_type=jnp.float32).reshape(N, D)

    # ---- projection: Linear -> BatchNorm1d (batch stats) -> ReLU -> Linear ----
    h = jnp.dot(pooled, w1_ref[...],
                preferred_element_type=jnp.float32) + bnp_ref[0, :]    # (N, H)

    # Exact per-batch BatchNorm statistics: reduce over each group's B axis only.
    hg = h.reshape(Gs, B, H)
    mean = jnp.mean(hg, axis=1, keepdims=True)
    var = jnp.mean((hg - mean) * (hg - mean), axis=1, keepdims=True)   # biased
    hg = (hg - mean) * jax.lax.rsqrt(var + BN_EPS)
    hg = hg * bnp_ref[1, :] + bnp_ref[2, :]                            # gamma, beta
    hg = jnp.maximum(hg, 0.0)                                          # ReLU

    # Output is lane-padded to 128 => unmasked full-lane store.
    out = jnp.dot(hg.reshape(N, H), w2_ref[...],
                  preferred_element_type=jnp.float32) + b2_ref[0, :]   # (N, O_pad)
    o_ref[...] = out.reshape(Gs, B, -1)


def projection_head_batched(xg, wa, ba, w1, b1, gamma, beta, w2, b2,
                            num_steps=None):
    """xg: (G, B, T, D) — G independent forward passes of the module.

    Groups are stacked Gs = G // num_steps per grid step so the matmuls see
    Gs*B rows and per-step overhead is amortized.  num_steps defaults to 2
    ("parallel") so v7x can split steps across its 2 TensorCores; on v5e/v6e
    the extra step costs only ~0.35 us.  BN statistics remain exact per batch.
    """
    G, B, T, D = xg.shape
    H = w1.shape[1]
    O = w2.shape[1]
    O_pad = max(LANE, -(-O // LANE) * LANE)

    if num_steps is None:
        num_steps = 2 if (G >= 2 and G % 2 == 0) else 1
    assert G % num_steps == 0, "G must divide evenly into grid steps"
    Gs = G // num_steps

    # Wrapper-side (one-time) param prep: lane-dense output weights, packed
    # per-feature vectors, scalar attention bias routed to SMEM.
    w2p = jnp.pad(w2, ((0, 0), (0, O_pad - O)))          # (H, O_pad)
    b2p = jnp.pad(b2, ((0, 0), (0, O_pad - O)))          # (1, O_pad)
    wa_row = wa.reshape(1, D)                            # (1, D)
    bnp = jnp.concatenate([b1, gamma, beta], axis=0)     # (3, H)
    ba_s = ba.reshape(1, 1).astype(jnp.float32)          # scalar -> SMEM

    out_pad = pl.pallas_call(
        _projection_head_kernel,
        out_shape=jax.ShapeDtypeStruct((G, B, O_pad), jnp.float32),
        grid=(num_steps,),
        in_specs=[
            pl.BlockSpec((Gs, B, T, D), lambda s: (s, 0, 0, 0)),        # x (Gs groups)
            pl.BlockSpec((1, D), lambda s: (0, 0)),                     # wa row
            pl.BlockSpec(memory_space=pltpu.MemorySpace.SMEM),          # ba scalar
            pl.BlockSpec((D, H), lambda s: (0, 0)),                     # w1
            pl.BlockSpec((3, H), lambda s: (0, 0)),                     # b1/gamma/beta
            pl.BlockSpec((H, O_pad), lambda s: (0, 0)),                 # w2 (padded)
            pl.BlockSpec((1, O_pad), lambda s: (0, 0)),                 # b2 (padded)
        ],
        out_specs=pl.BlockSpec((Gs, B, O_pad), lambda s: (s, 0, 0)),
        compiler_params=pltpu.CompilerParams(
            dimension_semantics=("parallel",),
            # Explicit budget: safe on v7x's 32 MiB scoped default; at these
            # toy shapes the x block is only Gs*B*T*D*4 bytes (a few KiB).
            vmem_limit_bytes=32 * 1024 * 1024),
    )(xg, wa_row, ba_s, w1, bnp, w2p, b2p)

    return out_pad[..., :O]


def projection_head(x, *params):
    """Single forward pass, identical to the PyTorch module: x (B, T, D) -> (B, O)."""
    return projection_head_batched(x[None], *params, num_steps=1)[0]


def init_params(key, D, H, O):
    """Deterministic synthetic parameters (PyTorch-Linear-style uniform init)."""
    ks = jax.random.split(key, 6)

    def lin(kw, kb, fan_in, fan_out):
        bound = 1.0 / math.sqrt(fan_in)
        w = jax.random.uniform(kw, (fan_in, fan_out), jnp.float32, -bound, bound)
        b = jax.random.uniform(kb, (1, fan_out), jnp.float32, -bound, bound)
        return w, b

    wa, ba = lin(ks[0], ks[1], D, 1)       # temporal_attn Linear(D, 1)
    w1, b1 = lin(ks[2], ks[3], D, H)       # projection Linear(D, H)
    w2, b2 = lin(ks[4], ks[5], H, O)       # projection Linear(H, O)
    gamma = jnp.ones((1, H), jnp.float32)  # BatchNorm1d weight
    beta = jnp.zeros((1, H), jnp.float32)  # BatchNorm1d bias
    return wa, ba, w1, b1, gamma, beta, w2, b2


def reference(x, wa, ba, w1, b1, gamma, beta, w2, b2):
    """Pure-JAX reference for one (B, T, D) batch (matches the PyTorch forward)."""
    scores = jnp.einsum('btd,do->bto', x, wa) + ba[0, 0]
    attn = jax.nn.softmax(scores, axis=1)
    pooled = jnp.sum(x * attn, axis=1)
    h = pooled @ w1 + b1[0]
    mean = h.mean(axis=0)
    var = ((h - mean) ** 2).mean(axis=0)
    h = (h - mean) / jnp.sqrt(var + BN_EPS) * gamma[0] + beta[0]
    h = jnp.maximum(h, 0.0)
    return h @ w2 + b2[0]


if __name__ == "__main__":
    # Small shapes consistent with the module: G groups of (batch=8, seq=8,
    # input_dim=32) with hidden_dim=32, output_dim=16.
    G, B, T, D, H, O = 4, 8, 8, 32, 32, 16

    key = jax.random.PRNGKey(0)
    kx, kp = jax.random.split(key)
    x = jax.random.normal(kx, (G, B, T, D), jnp.float32)
    params = init_params(kp, D, H, O)

    # Batched path: G independent forward passes, 2 grid steps of Gs=2 groups.
    out = jax.block_until_ready(projection_head_batched(x, *params))
    assert out.shape == (G, B, O)
    ref = jax.vmap(lambda xb: reference(xb, *params))(x)
    assert jnp.allclose(out, ref, atol=1e-4, rtol=1e-4), "batched mismatch vs reference"

    # Single-forward path (exactly the module's forward signature).
    out1 = jax.block_until_ready(projection_head(x[0], *params))
    assert out1.shape == (B, O)
    assert jnp.allclose(out1, reference(x[0], *params), atol=1e-4, rtol=1e-4), \
        "single-batch mismatch vs reference"

    print("KERNEL_OK")
</pallas_src>

<mosaic_0001>
module attributes {stable_mosaic.version = 11 : i64} {
  func.func @_projection_head_kernel(%arg0: i32, %arg1: memref<2x8x8x32xf32, #tpu.memory_space<vmem>>, %arg2: memref<1x32xf32, #tpu.memory_space<vmem>>, %arg3: memref<1x1xf32, #tpu.memory_space<smem>>, %arg4: memref<32x32xf32, #tpu.memory_space<vmem>>, %arg5: memref<3x32xf32, #tpu.memory_space<vmem>>, %arg6: memref<32x128xf32, #tpu.memory_space<vmem>>, %arg7: memref<1x128xf32, #tpu.memory_space<vmem>>, %arg8: memref<2x8x128xf32, #tpu.memory_space<vmem>>) attributes {dimension_semantics = [#tpu.dimension_semantics<parallel>], iteration_bounds = array<i64: 2>, scalar_prefetch = 0 : i64, scratch_operands = 0 : i64, tpu.core_type = #tpu.core_type<tc>, window_params = [{transform_indices = @transform_0, window_bounds = array<i64: 2, 8, 8, 32>}, {pipeline_mode = #tpu.pipeline_mode<synchronous>, transform_indices = @transform_1, window_bounds = array<i64: 1, 32>}, {transform_indices = @transform_2, window_bounds = array<i64: 1, 1>}, {pipeline_mode = #tpu.pipeline_mode<synchronous>, transform_indices = @transform_3, window_bounds = array<i64: 32, 32>}, {pipeline_mode = #tpu.pipeline_mode<synchronous>, transform_indices = @transform_4, window_bounds = array<i64: 3, 32>}, {pipeline_mode = #tpu.pipeline_mode<synchronous>, transform_indices = @transform_5, window_bounds = array<i64: 32, 128>}, {pipeline_mode = #tpu.pipeline_mode<synchronous>, transform_indices = @transform_6, window_bounds = array<i64: 1, 128>}, {transform_indices = @transform_7, window_bounds = array<i64: 2, 8, 128>}]} {
    %c0 = arith.constant 0 : index
    %c0_0 = arith.constant 0 : index
    %c0_1 = arith.constant 0 : index
    %c0_2 = arith.constant 0 : index
    %0 = vector.load %arg1[%c0, %c0_0, %c0_1, %c0_2] : memref<2x8x8x32xf32, #tpu.memory_space<vmem>>, vector<2x8x8x32xf32>
    %1 = vector.shape_cast %0 : vector<2x8x8x32xf32> to vector<16x8x32xf32>
    %c0_3 = arith.constant 0 : index
    %c0_4 = arith.constant 0 : index
    %2 = vector.load %arg2[%c0_3, %c0_4] : memref<1x32xf32, #tpu.memory_space<vmem>>, vector<1x32xf32>
    %3 = vector.shape_cast %2 : vector<1x32xf32> to vector<32xf32>
    %4 = vector.shape_cast %3 : vector<32xf32> to vector<1x1x32xf32>
    %5 = vector.broadcast %4 : vector<1x1x32xf32> to vector<16x8x32xf32>
    %6 = arith.mulf %1, %5 : vector<16x8x32xf32>
    %cst = arith.constant dense<0.000000e+00> : vector<16x8xf32>
    %7 = vector.multi_reduction <add>, %6, %cst [2] : vector<16x8x32xf32> to vector<16x8xf32>
    %c0_5 = arith.constant 0 : index
    %c0_6 = arith.constant 0 : index
    %8 = memref.load %arg3[%c0_5, %c0_6] : memref<1x1xf32, #tpu.memory_space<smem>>
    %9 = vector.broadcast %8 : f32 to vector<16x8xf32>
    %10 = arith.addf %7, %9 : vector<16x8xf32>
    %cst_7 = arith.constant dense<0xFF800000> : vector<16xf32>
    %11 = vector.multi_reduction <maximumf>, %10, %cst_7 [1] : vector<16x8xf32> to vector<16xf32>
    %12 = vector.shape_cast %11 : vector<16xf32> to vector<16x1xf32>
    %13 = vector.broadcast %12 : vector<16x1xf32> to vector<16x8xf32>
    %14 = arith.subf %10, %13 : vector<16x8xf32>
    %15 = math.exp %14 : vector<16x8xf32>
    %cst_8 = arith.constant dense<0.000000e+00> : vector<16xf32>
    %16 = vector.multi_reduction <add>, %15, %cst_8 [1] : vector<16x8xf32> to vector<16xf32>
    %17 = vector.shape_cast %16 : vector<16xf32> to vector<16x1xf32>
    %18 = tpu.reciprocal %17 : vector<16x1xf32> -> vector<16x1xf32>
    %19 = vector.broadcast %18 : vector<16x1xf32> to vector<16x8xf32>
    %20 = arith.mulf %15, %19 : vector<16x8xf32>
    %21 = vector.shape_cast %20 : vector<16x8xf32> to vector<16x1x8xf32>
    "tpu.trace_start"() <{level = 10 : i32, message = "nqt,ntd->nqd"}> : () -> ()
    %cst_9 = arith.constant dense<0.000000e+00> : vector<16x1x32xf32>
    %22 = tpu.matmul %21, %1, %cst_9 {dimension_numbers = #tpu.dot_dimension_numbers<[2], [1], [1], [2], [0, 0, 0, 1, 1, 2], [0], [0]>} : vector<16x1x8xf32>, vector<16x8x32xf32>, vector<16x1x32xf32> -> vector<16x1x32xf32>
    "tpu.trace_stop"() : () -> ()
    %23 = vector.shape_cast %22 : vector<16x1x32xf32> to vector<16x32xf32>
    %c0_10 = arith.constant 0 : index
    %c0_11 = arith.constant 0 : index
    %24 = vector.load %arg4[%c0_10, %c0_11] : memref<32x32xf32, #tpu.memory_space<vmem>>, vector<32x32xf32>
    %cst_12 = arith.constant dense<0.000000e+00> : vector<16x32xf32>
    %25 = tpu.matmul %23, %24, %cst_12 {dimension_numbers = #tpu.dot_dimension_numbers<[1], [0], [0], [1], [0, 0, 1, 1], [], []>} : vector<16x32xf32>, vector<32x32xf32>, vector<16x32xf32> -> vector<16x32xf32>
    %c0_13 = arith.constant 0 : index
    %c0_14 = arith.constant 0 : index
    %26 = vector.load %arg5[%c0_13, %c0_14] : memref<3x32xf32, #tpu.memory_space<vmem>>, vector<1x32xf32>
    %27 = vector.shape_cast %26 : vector<1x32xf32> to vector<32xf32>
    %28 = vector.shape_cast %27 : vector<32xf32> to vector<1x32xf32>
    %29 = vector.broadcast %28 : vector<1x32xf32> to vector<16x32xf32>
    %30 = arith.addf %25, %29 : vector<16x32xf32>
    %31 = vector.shape_cast %30 : vector<16x32xf32> to vector<2x8x32xf32>
    %cst_15 = arith.constant dense<0.000000e+00> : vector<2x32xf32>
    %32 = vector.multi_reduction <add>, %31, %cst_15 [1] : vector<2x8x32xf32> to vector<2x32xf32>
    %33 = vector.shape_cast %32 : vector<2x32xf32> to vector<2x1x32xf32>
    %cst_16 = arith.constant 8.000000e+00 : f32
    %34 = vector.broadcast %cst_16 : f32 to vector<2x1x32xf32>
    %35 = arith.divf %33, %34 : vector<2x1x32xf32>
    %36 = vector.broadcast %35 : vector<2x1x32xf32> to vector<2x8x32xf32>
    %37 = arith.subf %31, %36 : vector<2x8x32xf32>
    %38 = vector.broadcast %35 : vector<2x1x32xf32> to vector<2x8x32xf32>
    %39 = arith.subf %31, %38 : vector<2x8x32xf32>
    %40 = arith.mulf %37, %39 : vector<2x8x32xf32>
    %cst_17 = arith.constant dense<0.000000e+00> : vector<2x32xf32>
    %41 = vector.multi_reduction <add>, %40, %cst_17 [1] : vector<2x8x32xf32> to vector<2x32xf32>
    %42 = vector.shape_cast %41 : vector<2x32xf32> to vector<2x1x32xf32>
    %cst_18 = arith.constant 8.000000e+00 : f32
    %43 = vector.broadcast %cst_18 : f32 to vector<2x1x32xf32>
    %44 = arith.divf %42, %43 : vector<2x1x32xf32>
    %45 = vector.broadcast %35 : vector<2x1x32xf32> to vector<2x8x32xf32>
    %46 = arith.subf %31, %45 : vector<2x8x32xf32>
    %cst_19 = arith.constant 9.99999974E-6 : f32
    %47 = vector.broadcast %cst_19 : f32 to vector<2x1x32xf32>
    %48 = arith.addf %44, %47 : vector<2x1x32xf32>
    %49 = math.rsqrt %48 : vector<2x1x32xf32>
    %50 = vector.broadcast %49 : vector<2x1x32xf32> to vector<2x8x32xf32>
    %51 = arith.mulf %46, %50 : vector<2x8x32xf32>
    %c1 = arith.constant 1 : index
    %c0_20 = arith.constant 0 : index
    %52 = vector.load %arg5[%c1, %c0_20] : memref<3x32xf32, #tpu.memory_space<vmem>>, vector<1x32xf32>
    %53 = vector.shape_cast %52 : vector<1x32xf32> to vector<32xf32>
    %54 = vector.shape_cast %53 : vector<32xf32> to vector<1x1x32xf32>
    %55 = vector.broadcast %54 : vector<1x1x32xf32> to vector<2x8x32xf32>
    %56 = arith.mulf %51, %55 : vector<2x8x32xf32>
    %c2 = arith.constant 2 : index
    %c0_21 = arith.constant 0 : index
    %57 = vector.load %arg5[%c2, %c0_21] : memref<3x32xf32, #tpu.memory_space<vmem>>, vector<1x32xf32>
    %58 = vector.shape_cast %57 : vector<1x32xf32> to vector<32xf32>
    %59 = vector.shape_cast %58 : vector<32xf32> to vector<1x1x32xf32>
    %60 = vector.broadcast %59 : vector<1x1x32xf32> to vector<2x8x32xf32>
    %61 = arith.addf %56, %60 : vector<2x8x32xf32>
    %cst_22 = arith.constant 0.000000e+00 : f32
    %62 = vector.broadcast %cst_22 : f32 to vector<2x8x32xf32>
    %63 = arith.maximumf %61, %62 : vector<2x8x32xf32>
    %64 = vector.shape_cast %63 : vector<2x8x32xf32> to vector<16x32xf32>
    %c0_23 = arith.constant 0 : index
    %c0_24 = arith.constant 0 : index
    %65 = vector.load %arg6[%c0_23, %c0_24] : memref<32x128xf32, #tpu.memory_space<vmem>>, vector<32x128xf32>
    %cst_25 = arith.constant dense<0.000000e+00> : vector<16x128xf32>
    %66 = tpu.matmul %64, %65, %cst_25 {dimension_numbers = #tpu.dot_dimension_numbers<[1], [0], [0], [1], [0, 0, 1, 1], [], []>} : vector<16x32xf32>, vector<32x128xf32>, vector<16x128xf32> -> vector<16x128xf32>
    %c0_26 = arith.constant 0 : index
    %c0_27 = arith.constant 0 : index
    %67 = vector.load %arg7[%c0_26, %c0_27] : memref<1x128xf32, #tpu.memory_space<vmem>>, vector<1x128xf32>
    %68 = vector.shape_cast %67 : vector<1x128xf32> to vector<128xf32>
    %69 = vector.shape_cast %68 : vector<128xf32> to vector<1x128xf32>
    %70 = vector.broadcast %69 : vector<1x128xf32> to vector<16x128xf32>
    %71 = arith.addf %66, %70 : vector<16x128xf32>
    %72 = vector.shape_cast %71 : vector<16x128xf32> to vector<2x8x128xf32>
    %c0_28 = arith.constant 0 : index
    %c0_29 = arith.constant 0 : index
    %c0_30 = arith.constant 0 : index
    %73 = vector.load %arg8[%c0_28, %c0_29, %c0_30] : memref<2x8x128xf32, #tpu.memory_space<vmem>>, vector<2x8x128xf32>
    tpu.vector_store %arg8[%c0_28, %c0_29, %c0_30], %72 {strides = array<i32>} : memref<2x8x128xf32, #tpu.memory_space<vmem>>, vector<2x8x128xf32>,
    return
  }
  func.func @transform_0(%arg0: i32) -> (i32, i32, i32, i32) {
    %c0_i32 = arith.constant 0 : i32
    %c0_i32_0 = arith.constant 0 : i32
    %c0_i32_1 = arith.constant 0 : i32
    %c0_i32_2 = arith.constant 0 : i32
    return %arg0, %c0_i32, %c0_i32_0, %c0_i32_1 : i32, i32, i32, i32
  }
  func.func @transform_1(%arg0: i32) -> (i32, i32) {
    %c0_i32 = arith.constant 0 : i32
    %c0_i32_0 = arith.constant 0 : i32
    %c0_i32_1 = arith.constant 0 : i32
    return %c0_i32, %c0_i32_0 : i32, i32
  }
  func.func @transform_2(%arg0: i32) -> (i32, i32) {
    %c0_i32 = arith.constant 0 : i32
    %c0_i32_0 = arith.constant 0 : i32
    %c0_i32_1 = arith.constant 0 : i32
    return %c0_i32, %c0_i32_0 : i32, i32
  }
  func.func @transform_3(%arg0: i32) -> (i32, i32) {
    %c0_i32 = arith.constant 0 : i32
    %c0_i32_0 = arith.constant 0 : i32
    %c0_i32_1 = arith.constant 0 : i32
    return %c0_i32, %c0_i32_0 : i32, i32
  }
  func.func @transform_4(%arg0: i32) -> (i32, i32) {
    %c0_i32 = arith.constant 0 : i32
    %c0_i32_0 = arith.constant 0 : i32
    %c0_i32_1 = arith.constant 0 : i32
    return %c0_i32, %c0_i32_0 : i32, i32
  }
  func.func @transform_5(%arg0: i32) -> (i32, i32) {
    %c0_i32 = arith.constant 0 : i32
    %c0_i32_0 = arith.constant 0 : i32
    %c0_i32_1 = arith.constant 0 : i32
    return %c0_i32, %c0_i32_0 : i32, i32
  }
  func.func @transform_6(%arg0: i32) -> (i32, i32) {
    %c0_i32 = arith.constant 0 : i32
    %c0_i32_0 = arith.constant 0 : i32
    %c0_i32_1 = arith.constant 0 : i32
    return %c0_i32, %c0_i32_0 : i32, i32
  }
  func.func @transform_7(%arg0: i32) -> (i32, i32, i32) {
    %c0_i32 = arith.constant 0 : i32
    %c0_i32_0 = arith.constant 0 : i32
    %c0_i32_1 = arith.constant 0 : i32
    return %arg0, %c0_i32, %c0_i32_0 : i32, i32, i32
  }
}

</mosaic_0001>

<llo_original>
// kernel: tpu_custom_call.1
$region0: #{tpu_custom_call.1}
  #allocation0 [shape = 'u32[]', space=smem, size = 0x4, offset = 0x4, fixed_abs, tag = 'smem constant byte address 0x4 - core index']
  #allocation1 [shape = 'u32[144,128]{1,0:T(1,128)}', space=vmem, size = 0x12000, scoped, tag = 'internal scratch']
  #allocation2 [shape = 'f32[1,1]{1,0:T(1,128)S(6)}', space=smem, size = 0x200, scoped, tag = 'scoped memory for tpu_custom_call.1']
  %s0 = inlined_call_operand.hbm [shape: f32[4,8,8,32], index: 0, kind: input, shape index: {}]
  %s1 = inlined_call_operand.vmem [shape: f32[1,32], index: 1, kind: input, shape index: {}]
  %s2 = inlined_call_operand.<no memory space> [shape: f32[1,1], index: 2, kind: input, shape index: {}]
  %s3 = inlined_call_operand.hbm [shape: f32[32,32], index: 3, kind: input, shape index: {}]
  %s4 = inlined_call_operand.vmem [shape: f32[3,32], index: 4, kind: input, shape index: {}]
  %s5 = inlined_call_operand.hbm [shape: f32[32,128], index: 5, kind: input, shape index: {}]
  %s6 = inlined_call_operand.vmem [shape: f32[1,128], index: 6, kind: input, shape index: {}]
  %s7 = inlined_call_operand.hbm [shape: f32[4,8,128], index: 7, kind: output, shape index: {}]
  %s8 = sld [smem:[#allocation0]]
  $region73: #{tpu_custom_call.1} parent=0
    _
  %s10 = ssub.s32 1, %s8
  %s11 = scalar_select 0, %s10, %s8
  %12 = sst [smem:[#allocation2]] %s2
  $region1: #{tpu_custom_call.1} parent=0
    #allocation3 [shape = 'u8[131072]{0}', space=vmem, size = 0x20000, scoped, tag = 'input window, operand 0']
    #allocation4 [shape = 's32[2]{0}', space=sflag, size = 0x8, scoped, tag = 'scoped memory for tpu_custom_call.1']
    #allocation5 [shape = 's32[2]{0}', space=sflag, size = 0x8, scoped, tag = 'scoped memory for tpu_custom_call.1']
    #allocation6 [shape = 'u8[16384]{0}', space=vmem, size = 0x4000, scoped, tag = 'input window, operand 3, single buffered']
    #allocation7 [shape = 's32[1]{0}', space=sflag, size = 0x4, scoped, tag = 'scoped memory for tpu_custom_call.1']
    #allocation8 [shape = 'u8[16384]{0}', space=vmem, size = 0x4000, scoped, tag = 'input window, operand 5, single buffered']
    #allocation9 [shape = 'u8[16384]{0}', space=vmem, size = 0x4000, scoped, tag = 'output window, operand 0']
    %13 = vsyncpa [#allocation4], 0
    %s14 = scalar_lea.sflag [#allocation4], 1
    %15 = vsyncpa %s14, 0
    %16 = vsyncpa [#allocation7], 0
    %17 = vsyncpa [#allocation5], 0
    %s18 = scalar_lea.sflag [#allocation5], 1
    %19 = vsyncpa %s18, 0
    loop: start=0, step=1, limit=4
    $region2: #{tpu_custom_call.1} parent=1 // loop_pre_header
      _
    $region3: #{tpu_custom_call.1} parent=1 // loop_header
      %s21 = sphi 0, %s25
      %p22 = scmp.ge.s32.totalorder %s21, 4
      %s31 = sphi 0, %s33
      %s34 = sphi 0, %s31
      %s35 = sphi 0, %s34
      %s51 = sphi 0, %s35
      %s55 = sphi 0, %s55
      %s57 = sphi 0, %s55
      %s58 = sphi 0, %s57
      %s72 = sphi 0, %s58
      %s76 = sphi 0, %s76
      %s78 = sphi 0, %s76
      %s79 = sphi 0, %s78
      %s93 = sphi 0, %s79
      %s97 = sphi 0, %s97
      %s99 = sphi 0, %s97
      %s100 = sphi 0, %s99
      %s114 = sphi 0, %s100
      %s118 = sphi 0, %s118
      %s120 = sphi 0, %s118
      %s121 = sphi 0, %s120
      %s135 = sphi 0, %s121
      %s139 = sphi 0, %s139
      %s141 = sphi 0, %s139
      %s142 = sphi 0, %s141
      %s156 = sphi 0, %s142
      %s160 = sphi 0, %s160
      %s162 = sphi 0, %s160
      %s163 = sphi 0, %s162
      %s177 = sphi 0, %s163
      %s183 = sphi 0, %s185
      %s186 = sphi 0, %s183
      %s187 = sphi 0, %s186
      %s203 = sphi 0, %s187
    $region4: #{tpu_custom_call.1} parent=1 // loop_header_branch
      %24 = sbr.rel (%p22) target = $region8
    $region5: #{tpu_custom_call.1} parent=1 // loop_body
      %s26 = ssub.s32 %s21, 1
      %s27 = ssub.s32 %s21, 2
      %s28 = sadd.s32 %s21, 1
      %s29 = ssub.s32 %s21, %s28
      %p30 = scmp.eq.s32.totalorder %s29, 0
      %s32 = sadd.s32 %s31, 1
      %s33 = scalar_select %p30, %s31, %s32
      %p36 = pneg %p30
      %p37 = scmp.eq.s32.totalorder %s21, 1
      %p38 = por %p36, %p37
      %p39 = scmp.ne.s32.totalorder %s31, %s34
      %p40 = scmp.eq.s32.totalorder %s21, 0
      %p41 = por %p39, %p40
      %p42 = scmp.ne.s32.totalorder %s31, %s34
      %p43 = scmp.eq.s32.totalorder %s26, 1
      %p44 = por %p42, %p43
      %p45 = scmp.ne.s32.totalorder %s34, %s35
      %p46 = scmp.eq.s32.totalorder %s26, 0
      %p47 = por %p45, %p46
      %p48 = scmp.ne.s32.totalorder %s34, %s35
      %p49 = scmp.eq.s32.totalorder %s27, 1
      %p50 = por %p48, %p49
      %p52 = scmp.ne.s32.totalorder %s35, %s51
      %p53 = scmp.eq.s32.totalorder %s27, 0
      %p54 = por %p52, %p53
      %s56 = sadd.s32 %s55, 1
      %p59 = scmp.eq.s32.totalorder %s21, 1
      %p60 = scmp.ne.s32.totalorder %s55, %s57
      %p61 = scmp.eq.s32.totalorder %s21, 0
      %p62 = por %p60, %p61
      %p63 = scmp.ne.s32.totalorder %s55, %s57
      %p64 = scmp.eq.s32.totalorder %s26, 1
      %p65 = por %p63, %p64
      %p66 = scmp.ne.s32.totalorder %s57, %s58
      %p67 = scmp.eq.s32.totalorder %s26, 0
      %p68 = por %p66, %p67
      %p69 = scmp.ne.s32.totalorder %s57, %s58
      %p70 = scmp.eq.s32.totalorder %s27, 1
      %p71 = por %p69, %p70
      %p73 = scmp.ne.s32.totalorder %s58, %s72
      %p74 = scmp.eq.s32.totalorder %s27, 0
      %p75 = por %p73, %p74
      %s77 = sadd.s32 %s76, 1
      %p80 = scmp.eq.s32.totalorder %s21, 1
      %p81 = scmp.ne.s32.totalorder %s76, %s78
      %p82 = scmp.eq.s32.totalorder %s21, 0
      %p83 = por %p81, %p82
      %p84 = scmp.ne.s32.totalorder %s76, %s78
      %p85 = scmp.eq.s32.totalorder %s26, 1
      %p86 = por %p84, %p85
      %p87 = scmp.ne.s32.totalorder %s78, %s79
      %p88 = scmp.eq.s32.totalorder %s26, 0
      %p89 = por %p87, %p88
      %p90 = scmp.ne.s32.totalorder %s78, %s79
      %p91 = scmp.eq.s32.totalorder %s27, 1
      %p92 = por %p90, %p91
      %p94 = scmp.ne.s32.totalorder %s79, %s93
      %p95 = scmp.eq.s32.totalorder %s27, 0
      %p96 = por %p94, %p95
      %s98 = sadd.s32 %s97, 1
      %p101 = scmp.eq.s32.totalorder %s21, 1
      %p102 = scmp.ne.s32.totalorder %s97, %s99
      %p103 = scmp.eq.s32.totalorder %s21, 0
      %p104 = por %p102, %p103
      %p105 = scmp.ne.s32.totalorder %s97, %s99
      %p106 = scmp.eq.s32.totalorder %s26, 1
      %p107 = por %p105, %p106
      %p108 = scmp.ne.s32.totalorder %s99, %s100
      %p109 = scmp.eq.s32.totalorder %s26, 0
      %p110 = por %p108, %p109
      %p111 = scmp.ne.s32.totalorder %s99, %s100
      %p112 = scmp.eq.s32.totalorder %s27, 1
      %p113 = por %p111, %p112
      %p115 = scmp.ne.s32.totalorder %s100, %s114
      %p116 = scmp.eq.s32.totalorder %s27, 0
      %p117 = por %p115, %p116
      %s119 = sadd.s32 %s118, 1
      %p122 = scmp.eq.s32.totalorder %s21, 1
      %p123 = scmp.ne.s32.totalorder %s118, %s120
      %p124 = scmp.eq.s32.totalorder %s21, 0
      %p125 = por %p123, %p124
      %p126 = scmp.ne.s32.totalorder %s118, %s120
      %p127 = scmp.eq.s32.totalorder %s26, 1
      %p128 = por %p126, %p127
      %p129 = scmp.ne.s32.totalorder %s120, %s121
      %p130 = scmp.eq.s32.totalorder %s26, 0
      %p131 = por %p129, %p130
      %p132 = scmp.ne.s32.totalorder %s120, %s121
      %p133 = scmp.eq.s32.totalorder %s27, 1
      %p134 = por %p132, %p133
      %p136 = scmp.ne.s32.totalorder %s121, %s135
      %p137 = scmp.eq.s32.totalorder %s27, 0
      %p138 = por %p136, %p137
      %s140 = sadd.s32 %s139, 1
      %p143 = scmp.eq.s32.totalorder %s21, 1
      %p144 = scmp.ne.s32.totalorder %s139, %s141
      %p145 = scmp.eq.s32.totalorder %s21, 0
      %p146 = por %p144, %p145
      %p147 = scmp.ne.s32.totalorder %s139, %s141
      %p148 = scmp.eq.s32.totalorder %s26, 1
      %p149 = por %p147, %p148
      %p150 = scmp.ne.s32.totalorder %s141, %s142
      %p151 = scmp.eq.s32.totalorder %s26, 0
      %p152 = por %p150, %p151
      %p153 = scmp.ne.s32.totalorder %s141, %s142
      %p154 = scmp.eq.s32.totalorder %s27, 1
      %p155 = por %p153, %p154
      %p157 = scmp.ne.s32.totalorder %s142, %s156
      %p158 = scmp.eq.s32.totalorder %s27, 0
      %p159 = por %p157, %p158
      %s161 = sadd.s32 %s160, 1
      %p164 = scmp.eq.s32.totalorder %s21, 1
      %p165 = scmp.ne.s32.totalorder %s160, %s162
      %p166 = scmp.eq.s32.totalorder %s21, 0
      %p167 = por %p165, %p166
      %p168 = scmp.ne.s32.totalorder %s160, %s162
      %p169 = scmp.eq.s32.totalorder %s26, 1
      %p170 = por %p168, %p169
      %p171 = scmp.ne.s32.totalorder %s162, %s163
      %p172 = scmp.eq.s32.totalorder %s26, 0
      %p173 = por %p171, %p172
      %p174 = scmp.ne.s32.totalorder %s162, %s163
      %p175 = scmp.eq.s32.totalorder %s27, 1
      %p176 = por %p174, %p175
      %p178 = scmp.ne.s32.totalorder %s163, %s177
      %p179 = scmp.eq.s32.totalorder %s27, 0
      %p180 = por %p178, %p179
      %s181 = ssub.s32 %s21, %s28
      %p182 = scmp.eq.s32.totalorder %s181, 0
      %s184 = sadd.s32 %s183, 1
      %s185 = scalar_select %p182, %s183, %s184
      %p188 = pneg %p182
      %p189 = scmp.eq.s32.totalorder %s21, 1
      %p190 = por %p188, %p189
      %p191 = scmp.ne.s32.totalorder %s183, %s186
      %p192 = scmp.eq.s32.totalorder %s21, 0
      %p193 = por %p191, %p192
      %p194 = scmp.ne.s32.totalorder %s183, %s186
      %p195 = scmp.eq.s32.totalorder %s26, 1
      %p196 = por %p194, %p195
      %p197 = scmp.ne.s32.totalorder %s186, %s187
      %p198 = scmp.eq.s32.totalorder %s26, 0
      %p199 = por %p197, %p198
      %p200 = scmp.ne.s32.totalorder %s186, %s187
      %p201 = scmp.eq.s32.totalorder %s27, 1
      %p202 = por %p200, %p201
      %p204 = scmp.ne.s32.totalorder %s187, %s203
      %p205 = scmp.eq.s32.totalorder %s27, 0
      %p206 = por %p204, %p205
      %p207 = scmp.le.s32.totalorder 1, %s21
      %p208 = scmp.lt.s32.totalorder %s21, 3
      %p209 = pnand %p207, %p208
      %p210 = pneg %p209
      // Predicated region
      $region9: #{tpu_custom_call.1} parent=5 // pred_check
        _
      $region10: #{tpu_custom_call.1} parent=5 // pred_check_branch
        %212 = sbr.rel (%p209) target = $region12
      $region11: #{tpu_custom_call.1} parent=5 // pred_region
        %s213 = ssub.s32 %s21, 1
        // Predicated region
        $region13: #{tpu_custom_call.1} parent=11 // pred_check
          %p214 = pneg %p68
        $region14: #{tpu_custom_call.1} parent=11 // pred_check_branch
          %216 = sbr.rel (%p214) target = $region16
        $region15: #{tpu_custom_call.1} parent=11 // pred_region
          _
        $region16: #{tpu_custom_call.1} parent=11 // pred_fallthru
          _
        // Predicated region
        $region17: #{tpu_custom_call.1} parent=11 // pred_check
          %p217 = pneg %p89
        $region18: #{tpu_custom_call.1} parent=11 // pred_check_branch
          %219 = sbr.rel (%p217) target = $region20
        $region19: #{tpu_custom_call.1} parent=11 // pred_region
          _
        $region20: #{tpu_custom_call.1} parent=11 // pred_fallthru
          _
        // Predicated region
        $region21: #{tpu_custom_call.1} parent=11 // pred_check
          %p220 = pneg %p110
        $region22: #{tpu_custom_call.1} parent=11 // pred_check_branch
          %222 = sbr.rel (%p220) target = $region24
        $region23: #{tpu_custom_call.1} parent=11 // pred_region
          %s224 = ssub.s32 512, 512
          %225 = vsyncadd [#allocation7], %s224
          %s226 = sshll.u32 [#allocation6], 4
          %s227 = int_to_ptr.vmem [resolvable:$true] %s226
          %232 = dma.hbm_to_vmem [thread:$0]  %s3, 512, %s227, [#allocation7], 128, 128, 8
        $region24: #{tpu_custom_call.1} parent=11 // pred_fallthru
          _
        // Predicated region
        $region25: #{tpu_custom_call.1} parent=11 // pred_check
          %p233 = pneg %p131
        $region26: #{tpu_custom_call.1} parent=11 // pred_check_branch
          %235 = sbr.rel (%p233) target = $region28
        $region27: #{tpu_custom_call.1} parent=11 // pred_region
          _
        $region28: #{tpu_custom_call.1} parent=11 // pred_fallthru
          _
        // Predicated region
        $region29: #{tpu_custom_call.1} parent=11 // pred_check
          %p236 = pneg %p152
        $region30: #{tpu_custom_call.1} parent=11 // pred_check_branch
          %238 = sbr.rel (%p236) target = $region32
        $region31: #{tpu_custom_call.1} parent=11 // pred_region
          %s240 = ssub.s32 512, 512
          %241 = vsyncadd [#allocation7], %s240
          %s242 = sshll.u32 [#allocation8], 4
          %s243 = int_to_ptr.vmem [resolvable:$true] %s242
          %248 = dma.hbm_to_vmem [thread:$0]  %s5, 512, %s243, [#allocation7], 128, 128, 8
        $region32: #{tpu_custom_call.1} parent=11 // pred_fallthru
          _
        // Predicated region
        $region33: #{tpu_custom_call.1} parent=11 // pred_check
          %p249 = pneg %p173
        $region34: #{tpu_custom_call.1} parent=11 // pred_check_branch
          %251 = sbr.rel (%p249) target = $region36
        $region35: #{tpu_custom_call.1} parent=11 // pred_region
          _
        $region36: #{tpu_custom_call.1} parent=11 // pred_fallthru
          _
      $region12: #{tpu_custom_call.1} parent=5 // pred_fallthru
        _
      %p252 = scmp.lt.s32.totalorder %s21, 2
      // Predicated region
      $region37: #{tpu_custom_call.1} parent=5 // pred_check
        %p253 = pneg %p252
      $region38: #{tpu_custom_call.1} parent=5 // pred_check_branch
        %255 = sbr.rel (%p253) target = $region40
      $region39: #{tpu_custom_call.1} parent=5 // pred_region
        // Predicated region
        $region41: #{tpu_custom_call.1} parent=39 // pred_check
          %p256 = pneg %p41
        $region42: #{tpu_custom_call.1} parent=39 // pred_check_branch
          %258 = sbr.rel (%p256) target = $region44
        $region43: #{tpu_custom_call.1} parent=39 // pred_region
          %s259 = sand.u32 %s31, 1
          %s260 = scalar_lea.sflag [#allocation4], %s259
          %s261 = sand.u32 %s31, 1
          %s262 = smul.addr %s261, 128
          %s263 = scalar_lea.vmem [#allocation3], %s262
          %s264 = smul.u32 2, %s21
          %s266 = ssub.s32 2048, 2048
          %267 = vsyncadd %s260, %s266
          %s268 = smul.addr %s264, 8
          %s269 = smul.addr %s268, 128
          %s270 = scalar_lea.hbm %s0, %s269
          %s271 = sshll.u32 %s263, 4
          %s272 = int_to_ptr.vmem [resolvable:$true] %s271
          %277 = dma.hbm_to_vmem [thread:$0]  %s270, 2048, %s272, %s260, 128, 128, 8
        $region44: #{tpu_custom_call.1} parent=39 // pred_fallthru
          _
      $region40: #{tpu_custom_call.1} parent=5 // pred_fallthru
        _
      %p278 = scmp.le.s32.totalorder 1, %s21
      %p279 = scmp.lt.s32.totalorder %s21, 3
      %p280 = pnand %p278, %p279
      %p281 = pneg %p280
      // Predicated region
      $region45: #{tpu_custom_call.1} parent=5 // pred_check
        _
      $region46: #{tpu_custom_call.1} parent=5 // pred_check_branch
        %283 = sbr.rel (%p280) target = $region48
      $region47: #{tpu_custom_call.1} parent=5 // pred_region
        %s284 = ssub.s32 %s21, 1
        %s285 = sand.u32 %s34, 1
        %s286 = scalar_lea.sflag [#allocation4], %s285
        %s287 = sand.u32 %s34, 1
        %s288 = smul.addr %s287, 128
        %s289 = scalar_lea.vmem [#allocation3], %s288
        // Predicated region
        $region49: #{tpu_custom_call.1} parent=47 // pred_check
          %p290 = pneg %p47
        $region50: #{tpu_custom_call.1} parent=47 // pred_check_branch
          %292 = sbr.rel (%p290) target = $region52
        $region51: #{tpu_custom_call.1} parent=47 // pred_region
          %293 = dma.done %s286, 2048
        $region52: #{tpu_custom_call.1} parent=47 // pred_fallthru
          _
        // Predicated region
        $region53: #{tpu_custom_call.1} parent=47 // pred_check
          %p294 = pneg %p110
        $region54: #{tpu_custom_call.1} parent=47 // pred_check_branch
          %296 = sbr.rel (%p294) target = $region56
        $region55: #{tpu_custom_call.1} parent=47 // pred_region
          %297 = dma.done [#allocation7], 512
        $region56: #{tpu_custom_call.1} parent=47 // pred_fallthru
          _
        // Predicated region
        $region57: #{tpu_custom_call.1} parent=47 // pred_check
          %p298 = pneg %p152
        $region58: #{tpu_custom_call.1} parent=47 // pred_check_branch
          %300 = sbr.rel (%p298) target = $region60
        $region59: #{tpu_custom_call.1} parent=47 // pred_region
          %301 = dma.done [#allocation7], 512
        $region60: #{tpu_custom_call.1} parent=47 // pred_fallthru
          _
        %s302 = sand.u32 %s34, 1
        %s303 = scalar_lea.sflag [#allocation4], %s302
        %s304 = sand.u32 %s34, 1
        %s305 = smul.addr %s304, 128
        %s306 = scalar_lea.vmem [#allocation3], %s305
        %p307 = pneg %p47
        %p308 = pneg %p44
        %p309 = pneg %p68
        %p310 = pneg %p65
        %p311 = pneg %p89
        %p312 = pneg %p86
        %p313 = pneg %p110
        %p314 = pneg %p107
        %p315 = pneg %p131
        %p316 = pneg %p128
        %p317 = pneg %p152
        %p318 = pneg %p149
        %p319 = pneg %p173
        %p320 = pneg %p170
        %p321 = pneg %p199
        %p322 = pneg %p196
        %s323 = sand.u32 %s186, 1
        %s324 = scalar_lea.sflag [#allocation5], %s323
        %s325 = sand.u32 %s186, 1
        %s326 = smul.addr %s325, 16
        %s327 = scalar_lea.vmem [#allocation9], %s326
        %s328 = smul.u32 2, %s26
        %s329 = smul.u32 2, %s26
        %v330 = vld [vmem:[%s289] sm:$0xff]
        %v331 = vld [vmem:[%s289 + $0x8] sm:$0xff]
        %v332 = vld [vmem:[%s289 + $0x10] sm:$0xff]
        %v333 = vld [vmem:[%s289 + $0x18] sm:$0xff]
        %v334 = vld [vmem:[%s289 + $0x20] sm:$0xff]
        %v335 = vld [vmem:[%s289 + $0x28] sm:$0xff]
        %v336 = vld [vmem:[%s289 + $0x30] sm:$0xff]
        %v337 = vld [vmem:[%s289 + $0x38] sm:$0xff]
        %v338 = vld [vmem:[%s289 + $0x40] sm:$0xff]
        %v339 = vld [vmem:[%s289 + $0x48] sm:$0xff]
        %v340 = vld [vmem:[%s289 + $0x50] sm:$0xff]
        %v341 = vld [vmem:[%s289 + $0x58] sm:$0xff]
        %v342 = vld [vmem:[%s289 + $0x60] sm:$0xff]
        %v343 = vld [vmem:[%s289 + $0x68] sm:$0xff]
        %v344 = vld [vmem:[%s289 + $0x70] sm:$0xff]
        %v345 = vld [vmem:[%s289 + $0x78] sm:$0xff]
        %v346 = vld [vmem:[%s1] sm:$0x1]
        %v348 = vlaneseq
        %v349 = vshrl.u32 %v348, 7
        %v350 = vsub.s32 0, %v349
        %v351 = vrot.slane %v346, %v350
        %v353 = vmul.f32 %v330, %v351
        %v354 = vmul.f32 %v331, %v351
        %v355 = vmul.f32 %v332, %v351
        %v356 = vmul.f32 %v333, %v351
        %v357 = vmul.f32 %v334, %v351
        %v358 = vmul.f32 %v335, %v351
        %v359 = vmul.f32 %v336, %v351
        %v360 = vmul.f32 %v337, %v351
        %v361 = vmul.f32 %v338, %v351
        %v362 = vmul.f32 %v339, %v351
        %v363 = vmul.f32 %v340, %v351
        %v364 = vmul.f32 %v341, %v351
        %v365 = vmul.f32 %v342, %v351
        %v366 = vmul.f32 %v343, %v351
        %v367 = vmul.f32 %v344, %v351
        %v368 = vmul.f32 %v345, %v351
        %vm369 = vcmask 261120
        %v370 = vsel %vm369, %v353, 0.0
        %371 = vadd.xlane.f32.xlu0 %v370
        %v372 = vpop.xlane.xlu0 %371
        %v373 = vsel %vm369, %v354, 0.0
        %374 = vadd.xlane.f32.xlu0 %v373
        %v375 = vpop.xlane.xlu0 %374
        %v376 = vsel %vm369, %v355, 0.0
        %377 = vadd.xlane.f32.xlu0 %v376
        %v378 = vpop.xlane.xlu0 %377
        %v379 = vsel %vm369, %v356, 0.0
        %380 = vadd.xlane.f32.xlu0 %v379
        %v381 = vpop.xlane.xlu0 %380
        %v382 = vsel %vm369, %v357, 0.0
        %383 = vadd.xlane.f32.xlu0 %v382
        %v384 = vpop.xlane.xlu0 %383
        %v385 = vsel %vm369, %v358, 0.0
        %386 = vadd.xlane.f32.xlu0 %v385
        %v387 = vpop.xlane.xlu0 %386
        %v388 = vsel %vm369, %v359, 0.0
        %389 = vadd.xlane.f32.xlu0 %v388
        %v390 = vpop.xlane.xlu0 %389
        %v391 = vsel %vm369, %v360, 0.0
        %392 = vadd.xlane.f32.xlu0 %v391
        %v393 = vpop.xlane.xlu0 %392
        %v394 = vsel %vm369, %v361, 0.0
        %395 = vadd.xlane.f32.xlu0 %v394
        %v396 = vpop.xlane.xlu0 %395
        %v397 = vsel %vm369, %v362, 0.0
        %398 = vadd.xlane.f32.xlu0 %v397
        %v399 = vpop.xlane.xlu0 %398
        %v400 = vsel %vm369, %v363, 0.0
        %401 = vadd.xlane.f32.xlu0 %v400
        %v402 = vpop.xlane.xlu0 %401
        %v403 = vsel %vm369, %v364, 0.0
        %404 = vadd.xlane.f32.xlu0 %v403
        %v405 = vpop.xlane.xlu0 %404
        %v406 = vsel %vm369, %v365, 0.0
        %407 = vadd.xlane.f32.xlu0 %v406
        %v408 = vpop.xlane.xlu0 %407
        %v409 = vsel %vm369, %v366, 0.0
        %410 = vadd.xlane.f32.xlu0 %v409
        %v411 = vpop.xlane.xlu0 %410
        %v412 = vsel %vm369, %v367, 0.0
        %413 = vadd.xlane.f32.xlu0 %v412
        %v414 = vpop.xlane.xlu0 %413
        %v415 = vsel %vm369, %v368, 0.0
        %416 = vadd.xlane.f32.xlu0 %v415
        %v417 = vpop.xlane.xlu0 %416
        %s418 = sld [smem:[#allocation2]]
        %v419 = vstv %s418
        %v420 = vadd.f32 %v372, %v419
        %v421 = vadd.f32 %v375, %v419
        %v422 = vadd.f32 %v378, %v419
        %v423 = vadd.f32 %v381, %v419
        %v424 = vadd.f32 %v384, %v419
        %v425 = vadd.f32 %v387, %v419
        %v426 = vadd.f32 %v390, %v419
        %v427 = vadd.f32 %v393, %v419
        %v428 = vadd.f32 %v396, %v419
        %v429 = vadd.f32 %v399, %v419
        %v430 = vadd.f32 %v402, %v419
        %v431 = vadd.f32 %v405, %v419
        %v432 = vadd.f32 %v408, %v419
        %v433 = vadd.f32 %v411, %v419
        %v434 = vadd.f32 %v414, %v419
        %v435 = vadd.f32 %v417, %v419
        %v452 = vlaneseq
        %v453 = vand.u32 %v452, 127
        %v454 = vlaneseq
        %v455 = vshrl.u32 %v454, 7
        %v456 = vsub.s32 %v453, %v455
        %v457 = vrot.slane %v420, %v456
        %v458 = vlaneseq
        %v459 = vshrl.u32 %v458, 7
        %v460 = vsub.s32 %v453, %v459
        %v461 = vrot.slane %v421, %v460
        %v462 = vlaneseq
        %v463 = vshrl.u32 %v462, 7
        %v464 = vsub.s32 %v453, %v463
        %v465 = vrot.slane %v422, %v464
        %v466 = vlaneseq
        %v467 = vshrl.u32 %v466, 7
        %v468 = vsub.s32 %v453, %v467
        %v469 = vrot.slane %v423, %v468
        %v470 = vlaneseq
        %v471 = vshrl.u32 %v470, 7
        %v472 = vsub.s32 %v453, %v471
        %v473 = vrot.slane %v424, %v472
        %v474 = vlaneseq
        %v475 = vshrl.u32 %v474, 7
        %v476 = vsub.s32 %v453, %v475
        %v477 = vrot.slane %v425, %v476
        %v478 = vlaneseq
        %v479 = vshrl.u32 %v478, 7
        %v480 = vsub.s32 %v453, %v479
        %v481 = vrot.slane %v426, %v480
        %v482 = vlaneseq
        %v483 = vshrl.u32 %v482, 7
        %v484 = vsub.s32 %v453, %v483
        %v485 = vrot.slane %v427, %v484
        %v486 = vlaneseq
        %v487 = vshrl.u32 %v486, 7
        %v488 = vsub.s32 %v453, %v487
        %v489 = vrot.slane %v428, %v488
        %v490 = vlaneseq
        %v491 = vshrl.u32 %v490, 7
        %v492 = vsub.s32 %v453, %v491
        %v493 = vrot.slane %v429, %v492
        %v494 = vlaneseq
        %v495 = vshrl.u32 %v494, 7
        %v496 = vsub.s32 %v453, %v495
        %v497 = vrot.slane %v430, %v496
        %v498 = vlaneseq
        %v499 = vshrl.u32 %v498, 7
        %v500 = vsub.s32 %v453, %v499
        %v501 = vrot.slane %v431, %v500
        %v502 = vlaneseq
        %v503 = vshrl.u32 %v502, 7
        %v504 = vsub.s32 %v453, %v503
        %v505 = vrot.slane %v432, %v504
        %v506 = vlaneseq
        %v507 = vshrl.u32 %v506, 7
        %v508 = vsub.s32 %v453, %v507
        %v509 = vrot.slane %v433, %v508
        %v510 = vlaneseq
        %v511 = vshrl.u32 %v510, 7
        %v512 = vsub.s32 %v453, %v511
        %v513 = vrot.slane %v434, %v512
        %v514 = vlaneseq
        %v515 = vshrl.u32 %v514, 7
        %v516 = vsub.s32 %v453, %v515
        %v517 = vrot.slane %v435, %v516
        %vm518 = vcmask 1041409
        %v519 = vsel %vm518, %v461, %v457
        %vm520 = vcmask 1042434
        %v521 = vsel %vm520, %v465, %v519
        %vm522 = vcmask 1043459
        %v523 = vsel %vm522, %v469, %v521
        %vm524 = vcmask 1044484
        %v525 = vsel %vm524, %v473, %v523
        %vm526 = vcmask 1045509
        %v527 = vsel %vm526, %v477, %v525
        %vm528 = vcmask 1046534
        %v529 = vsel %vm528, %v481, %v527
        %vm530 = vcmask 1047559
        %v531 = vsel %vm530, %v485, %v529
        %v532 = vsel %vm518, %v493, %v489
        %v533 = vsel %vm520, %v497, %v532
        %v534 = vsel %vm522, %v501, %v533
        %v535 = vsel %vm524, %v505, %v534
        %v536 = vsel %vm526, %v509, %v535
        %v537 = vsel %vm528, %v513, %v536
        %v538 = vsel %vm530, %v517, %v537
        %vm541 = vcmask 64512
        %v542 = vsel %vm541, %v531, -inf
        %543 = vmax.xlane.f32.xlu0 %v542
        %v544 = vpop.xlane.xlu0 %543
        %v545 = vsel %vm541, %v538, -inf
        %546 = vmax.xlane.f32.xlu0 %v545
        %v547 = vpop.xlane.xlu0 %546
        %v550 = vlaneseq
        %v551 = vshrl.u32 %v550, 7
        %v552 = vsub.s32 0, %v551
        %v553 = vrot.slane %v544, %v552
        %v554 = vlaneseq
        %v555 = vshrl.u32 %v554, 7
        %v556 = vsub.s32 1, %v555
        %v557 = vrot.slane %v544, %v556
        %v558 = vlaneseq
        %v559 = vshrl.u32 %v558, 7
        %v560 = vsub.s32 2, %v559
        %v561 = vrot.slane %v544, %v560
        %v562 = vlaneseq
        %v563 = vshrl.u32 %v562, 7
        %v564 = vsub.s32 3, %v563
        %v565 = vrot.slane %v544, %v564
        %v566 = vlaneseq
        %v567 = vshrl.u32 %v566, 7
        %v568 = vsub.s32 4, %v567
        %v569 = vrot.slane %v544, %v568
        %v570 = vlaneseq
        %v571 = vshrl.u32 %v570, 7
        %v572 = vsub.s32 5, %v571
        %v573 = vrot.slane %v544, %v572
        %v574 = vlaneseq
        %v575 = vshrl.u32 %v574, 7
        %v576 = vsub.s32 6, %v575
        %v577 = vrot.slane %v544, %v576
        %v578 = vlaneseq
        %v579 = vshrl.u32 %v578, 7
        %v580 = vsub.s32 7, %v579
        %v581 = vrot.slane %v544, %v580
        %v582 = vlaneseq
        %v583 = vshrl.u32 %v582, 7
        %v584 = vsub.s32 0, %v583
        %v585 = vrot.slane %v547, %v584
        %v586 = vlaneseq
        %v587 = vshrl.u32 %v586, 7
        %v588 = vsub.s32 1, %v587
        %v589 = vrot.slane %v547, %v588
        %v590 = vlaneseq
        %v591 = vshrl.u32 %v590, 7
        %v592 = vsub.s32 2, %v591
        %v593 = vrot.slane %v547, %v592
        %v594 = vlaneseq
        %v595 = vshrl.u32 %v594, 7
        %v596 = vsub.s32 3, %v595
        %v597 = vrot.slane %v547, %v596
        %v598 = vlaneseq
        %v599 = vshrl.u32 %v598, 7
        %v600 = vsub.s32 4, %v599
        %v601 = vrot.slane %v547, %v600
        %v602 = vlaneseq
        %v603 = vshrl.u32 %v602, 7
        %v604 = vsub.s32 5, %v603
        %v605 = vrot.slane %v547, %v604
        %v606 = vlaneseq
        %v607 = vshrl.u32 %v606, 7
        %v608 = vsub.s32 6, %v607
        %v609 = vrot.slane %v547, %v608
        %v610 = vlaneseq
        %v611 = vshrl.u32 %v610, 7
        %v612 = vsub.s32 7, %v611
        %v613 = vrot.slane %v547, %v612
        %v630 = vsub.f32 %v420, %v553
        %v631 = vsub.f32 %v421, %v557
        %v632 = vsub.f32 %v422, %v561
        %v633 = vsub.f32 %v423, %v565
        %v634 = vsub.f32 %v424, %v569
        %v635 = vsub.f32 %v425, %v573
        %v636 = vsub.f32 %v426, %v577
        %v637 = vsub.f32 %v427, %v581
        %v638 = vsub.f32 %v428, %v585
        %v639 = vsub.f32 %v429, %v589
        %v640 = vsub.f32 %v430, %v593
        %v641 = vsub.f32 %v431, %v597
        %v642 = vsub.f32 %v432, %v601
        %v643 = vsub.f32 %v433, %v605
        %v644 = vsub.f32 %v434, %v609
        %v645 = vsub.f32 %v435, %v613
        %v646 = vmul.f32 %v630, 1.442695
        %v647 = vpow.pop %v646
        %v648 = vmul.f32 %v631, 1.442695
        %v649 = vpow.pop %v648
        %v650 = vmul.f32 %v632, 1.442695
        %v651 = vpow.pop %v650
        %v652 = vmul.f32 %v633, 1.442695
        %v653 = vpow.pop %v652
        %v654 = vmul.f32 %v634, 1.442695
        %v655 = vpow.pop %v654
        %v656 = vmul.f32 %v635, 1.442695
        %v657 = vpow.pop %v656
        %v658 = vmul.f32 %v636, 1.442695
        %v659 = vpow.pop %v658
        %v660 = vmul.f32 %v637, 1.442695
        %v661 = vpow.pop %v660
        %v662 = vmul.f32 %v638, 1.442695
        %v663 = vpow.pop %v662
        %v664 = vmul.f32 %v639, 1.442695
        %v665 = vpow.pop %v664
        %v666 = vmul.f32 %v640, 1.442695
        %v667 = vpow.pop %v666
        %v668 = vmul.f32 %v641, 1.442695
        %v669 = vpow.pop %v668
        %v670 = vmul.f32 %v642, 1.442695
        %v671 = vpow.pop %v670
        %v672 = vmul.f32 %v643, 1.442695
        %v673 = vpow.pop %v672
        %v674 = vmul.f32 %v644, 1.442695
        %v675 = vpow.pop %v674
        %v676 = vmul.f32 %v645, 1.442695
        %v677 = vpow.pop %v676
        %694 = vset.pattern.permute.xlu0 0
        %695 = vperm.xlu0 %694, %v647
        %v696 = vpop.permute.xlu0 %695
        %697 = vset.pattern.permute.xlu0 0
        %698 = vperm.xlu0 %697, %v649
        %v699 = vpop.permute.xlu0 %698
        %700 = vset.pattern.permute.xlu0 0
        %701 = vperm.xlu0 %700, %v651
        %v702 = vpop.permute.xlu0 %701
        %703 = vset.pattern.permute.xlu0 0
        %704 = vperm.xlu0 %703, %v653
        %v705 = vpop.permute.xlu0 %704
        %706 = vset.pattern.permute.xlu0 0
        %707 = vperm.xlu0 %706, %v655
        %v708 = vpop.permute.xlu0 %707
        %709 = vset.pattern.permute.xlu0 0
        %710 = vperm.xlu0 %709, %v657
        %v711 = vpop.permute.xlu0 %710
        %712 = vset.pattern.permute.xlu0 0
        %713 = vperm.xlu0 %712, %v659
        %v714 = vpop.permute.xlu0 %713
        %715 = vset.pattern.permute.xlu0 0
        %716 = vperm.xlu0 %715, %v661
        %v717 = vpop.permute.xlu0 %716
        %718 = vset.pattern.permute.xlu0 0
        %719 = vperm.xlu0 %718, %v663
        %v720 = vpop.permute.xlu0 %719
        %721 = vset.pattern.permute.xlu0 0
        %722 = vperm.xlu0 %721, %v665
        %v723 = vpop.permute.xlu0 %722
        %724 = vset.pattern.permute.xlu0 0
        %725 = vperm.xlu0 %724, %v667
        %v726 = vpop.permute.xlu0 %725
        %727 = vset.pattern.permute.xlu0 0
        %728 = vperm.xlu0 %727, %v669
        %v729 = vpop.permute.xlu0 %728
        %730 = vset.pattern.permute.xlu0 0
        %731 = vperm.xlu0 %730, %v671
        %v732 = vpop.permute.xlu0 %731
        %733 = vset.pattern.permute.xlu0 0
        %734 = vperm.xlu0 %733, %v673
        %v735 = vpop.permute.xlu0 %734
        %736 = vset.pattern.permute.xlu0 0
        %737 = vperm.xlu0 %736, %v675
        %v738 = vpop.permute.xlu0 %737
        %739 = vset.pattern.permute.xlu0 0
        %740 = vperm.xlu0 %739, %v677
        %v741 = vpop.permute.xlu0 %740
        %v742 = vlaneseq
        %v743 = vshrl.u32 %v742, 7
        %v744 = vsub.s32 %v453, %v743
        %v745 = vrot.slane %v696, %v744
        %v746 = vlaneseq
        %v747 = vshrl.u32 %v746, 7
        %v748 = vsub.s32 %v453, %v747
        %v749 = vrot.slane %v699, %v748
        %v750 = vlaneseq
        %v751 = vshrl.u32 %v750, 7
        %v752 = vsub.s32 %v453, %v751
        %v753 = vrot.slane %v702, %v752
        %v754 = vlaneseq
        %v755 = vshrl.u32 %v754, 7
        %v756 = vsub.s32 %v453, %v755
        %v757 = vrot.slane %v705, %v756
        %v758 = vlaneseq
        %v759 = vshrl.u32 %v758, 7
        %v760 = vsub.s32 %v453, %v759
        %v761 = vrot.slane %v708, %v760
        %v762 = vlaneseq
        %v763 = vshrl.u32 %v762, 7
        %v764 = vsub.s32 %v453, %v763
        %v765 = vrot.slane %v711, %v764
        %v766 = vlaneseq
        %v767 = vshrl.u32 %v766, 7
        %v768 = vsub.s32 %v453, %v767
        %v769 = vrot.slane %v714, %v768
        %v770 = vlaneseq
        %v771 = vshrl.u32 %v770, 7
        %v772 = vsub.s32 %v453, %v771
        %v773 = vrot.slane %v717, %v772
        %v774 = vlaneseq
        %v775 = vshrl.u32 %v774, 7
        %v776 = vsub.s32 %v453, %v775
        %v777 = vrot.slane %v720, %v776
        %v778 = vlaneseq
        %v779 = vshrl.u32 %v778, 7
        %v780 = vsub.s32 %v453, %v779
        %v781 = vrot.slane %v723, %v780
        %v782 = vlaneseq
        %v783 = vshrl.u32 %v782, 7
        %v784 = vsub.s32 %v453, %v783
        %v785 = vrot.slane %v726, %v784
        %v786 = vlaneseq
        %v787 = vshrl.u32 %v786, 7
        %v788 = vsub.s32 %v453, %v787
        %v789 = vrot.slane %v729, %v788
        %v790 = vlaneseq
        %v791 = vshrl.u32 %v790, 7
        %v792 = vsub.s32 %v453, %v791
        %v793 = vrot.slane %v732, %v792
        %v794 = vlaneseq
        %v795 = vshrl.u32 %v794, 7
        %v796 = vsub.s32 %v453, %v795
        %v797 = vrot.slane %v735, %v796
        %v798 = vlaneseq
        %v799 = vshrl.u32 %v798, 7
        %v800 = vsub.s32 %v453, %v799
        %v801 = vrot.slane %v738, %v800
        %v802 = vlaneseq
        %v803 = vshrl.u32 %v802, 7
        %v804 = vsub.s32 %v453, %v803
        %v805 = vrot.slane %v741, %v804
        %v806 = vsel %vm518, %v749, %v745
        %v807 = vsel %vm520, %v753, %v806
        %v808 = vsel %vm522, %v757, %v807
        %v809 = vsel %vm524, %v761, %v808
        %v810 = vsel %vm526, %v765, %v809
        %v811 = vsel %vm528, %v769, %v810
        %v812 = vsel %vm530, %v773, %v811
        %v813 = vsel %vm518, %v781, %v777
        %v814 = vsel %vm520, %v785, %v813
        %v815 = vsel %vm522, %v789, %v814
        %v816 = vsel %vm524, %v793, %v815
        %v817 = vsel %vm526, %v797, %v816
        %v818 = vsel %vm528, %v801, %v817
        %v819 = vsel %vm530, %v805, %v818
        %v822 = vsel %vm541, %v812, 0.0
        %823 = vadd.xlane.f32.xlu0 %v822
        %v824 = vpop.xlane.xlu0 %823
        %v825 = vsel %vm541, %v819, 0.0
        %826 = vadd.xlane.f32.xlu0 %v825
        %v827 = vpop.xlane.xlu0 %826
        %v828 = vrcp.pop %v824
        %v829 = vrcp.pop %v827
        %v832 = vlaneseq
        %v833 = vshrl.u32 %v832, 7
        %v834 = vsub.s32 0, %v833
        %v835 = vrot.slane %v828, %v834
        %v836 = vlaneseq
        %v837 = vshrl.u32 %v836, 7
        %v838 = vsub.s32 1, %v837
        %v839 = vrot.slane %v828, %v838
        %v840 = vlaneseq
        %v841 = vshrl.u32 %v840, 7
        %v842 = vsub.s32 2, %v841
        %v843 = vrot.slane %v828, %v842
        %v844 = vlaneseq
        %v845 = vshrl.u32 %v844, 7
        %v846 = vsub.s32 3, %v845
        %v847 = vrot.slane %v828, %v846
        %v848 = vlaneseq
        %v849 = vshrl.u32 %v848, 7
        %v850 = vsub.s32 4, %v849
        %v851 = vrot.slane %v828, %v850
        %v852 = vlaneseq
        %v853 = vshrl.u32 %v852, 7
        %v854 = vsub.s32 5, %v853
        %v855 = vrot.slane %v828, %v854
        %v856 = vlaneseq
        %v857 = vshrl.u32 %v856, 7
        %v858 = vsub.s32 6, %v857
        %v859 = vrot.slane %v828, %v858
        %v860 = vlaneseq
        %v861 = vshrl.u32 %v860, 7
        %v862 = vsub.s32 7, %v861
        %v863 = vrot.slane %v828, %v862
        %v864 = vlaneseq
        %v865 = vshrl.u32 %v864, 7
        %v866 = vsub.s32 0, %v865
        %v867 = vrot.slane %v829, %v866
        %v868 = vlaneseq
        %v869 = vshrl.u32 %v868, 7
        %v870 = vsub.s32 1, %v869
        %v871 = vrot.slane %v829, %v870
        %v872 = vlaneseq
        %v873 = vshrl.u32 %v872, 7
        %v874 = vsub.s32 2, %v873
        %v875 = vrot.slane %v829, %v874
        %v876 = vlaneseq
        %v877 = vshrl.u32 %v876, 7
        %v878 = vsub.s32 3, %v877
        %v879 = vrot.slane %v829, %v878
        %v880 = vlaneseq
        %v881 = vshrl.u32 %v880, 7
        %v882 = vsub.s32 4, %v881
        %v883 = vrot.slane %v829, %v882
        %v884 = vlaneseq
        %v885 = vshrl.u32 %v884, 7
        %v886 = vsub.s32 5, %v885
        %v887 = vrot.slane %v829, %v886
        %v888 = vlaneseq
        %v889 = vshrl.u32 %v888, 7
        %v890 = vsub.s32 6, %v889
        %v891 = vrot.slane %v829, %v890
        %v892 = vlaneseq
        %v893 = vshrl.u32 %v892, 7
        %v894 = vsub.s32 7, %v893
        %v895 = vrot.slane %v829, %v894
        %v912 = vmul.f32 %v647, %v835
        %v913 = vmul.f32 %v649, %v839
        %v914 = vmul.f32 %v651, %v843
        %v915 = vmul.f32 %v653, %v847
        %v916 = vmul.f32 %v655, %v851
        %v917 = vmul.f32 %v657, %v855
        %v918 = vmul.f32 %v659, %v859
        %v919 = vmul.f32 %v661, %v863
        %v920 = vmul.f32 %v663, %v867
        %v921 = vmul.f32 %v665, %v871
        %v922 = vmul.f32 %v667, %v875
        %v923 = vmul.f32 %v669, %v879
        %v924 = vmul.f32 %v671, %v883
        %v925 = vmul.f32 %v673, %v887
        %v926 = vmul.f32 %v675, %v891
        %v927 = vmul.f32 %v677, %v895
        %929 = vset.pattern.permute.xlu0 0
        %930 = vperm.xlu0 %929, %v912
        %v931 = vpop.permute.xlu0 %930
        %v932 = vlaneseq
        %v933 = vshrl.u32 %v932, 7
        %v934 = vsub.s32 %v453, %v933
        %v935 = vrot.slane %v931, %v934
        %v936 = vsel %vm541, %v935, 0
        %938 = vmatprep.subr.mxu0 0.0
        %939 = vmatpush1.msra.mxu0 %v330
        %940 = vmatprep.subr.mxu0 0.0
        %941 = vmatpush1.msra.mxu0 0.0
        %942 = vmatprep.subr.mxu0 0.0
        %943 = vmatpush1.msra.mxu0 0.0
        %944 = vmatprep.subr.mxu0 0.0
        %945 = vmatpush1.msra.mxu0 0.0
        %946 = vmatprep.subr.mxu0 0.0
        %947 = vmatpush1.msra.mxu0 0.0
        %948 = vmatprep.subr.mxu0 0.0
        %949 = vmatpush1.msra.mxu0 0.0
        %950 = vmatprep.subr.mxu0 0.0
        %951 = vmatpush1.msra.mxu0 0.0
        %952 = vmatprep.subr.mxu0 0.0
        %953 = vmatpush1.msra.mxu0 0.0
        %954 = vmatprep.subr.mxu0 0.0
        %955 = vmatpush1.msra.mxu0 0.0
        %956 = vmatprep.subr.mxu0 0.0
        %957 = vmatpush1.msra.mxu0 0.0
        %958 = vmatprep.subr.mxu0 0.0
        %959 = vmatpush1.msra.mxu0 0.0
        %960 = vmatprep.subr.mxu0 0.0
        %961 = vmatpush1.msra.mxu0 0.0
        %962 = vmatprep.subr.mxu0 0.0
        %963 = vmatpush1.msra.mxu0 0.0
        %964 = vmatprep.subr.mxu0 0.0
        %965 = vmatpush1.msra.mxu0 0.0
        %966 = vmatprep.subr.mxu0 0.0
        %967 = vmatpush1.msra.mxu0 0.0
        %968 = vmatprep.subr.mxu0 0.0
        %969 = vmatpush1.msra.mxu0 0.0
        %970 = vmatprep.subr.mxu0 0.0
        %971 = vmatpush1.msra.mxu0 0.0
        %972 = vmatprep.subr.mxu0 0.0
        %973 = vmatpush1.msra.mxu0 0.0
        %974 = vmatprep.subr.mxu0 0.0
        %975 = vmatpush1.msra.mxu0 0.0
        %976 = vmatprep.subr.mxu0 0.0
        %977 = vmatpush1.msra.mxu0 0.0
        %978 = vmatprep.subr.mxu0 0.0
        %979 = vmatpush1.msra.mxu0 0.0
        %980 = vmatprep.subr.mxu0 0.0
        %981 = vmatpush1.msra.mxu0 0.0
        %982 = vmatprep.subr.mxu0 0.0
        %983 = vmatpush1.msra.mxu0 0.0
        %984 = vmatprep.subr.mxu0 0.0
        %985 = vmatpush1.msra.mxu0 0.0
        %986 = vmatprep.subr.mxu0 0.0
        %987 = vmatpush1.msra.mxu0 0.0
        %988 = vmatprep.subr.mxu0 0.0
        %989 = vmatpush1.msra.mxu0 0.0
        %990 = vmatprep.subr.mxu0 0.0
        %991 = vmatpush1.msra.mxu0 0.0
        %992 = vmatprep.subr.mxu0 0.0
        %993 = vmatpush1.msra.mxu0 0.0
        %994 = vmatprep.subr.mxu0 0.0
        %995 = vmatpush1.msra.mxu0 0.0
        %996 = vmatprep.subr.mxu0 0.0
        %997 = vmatpush1.msra.mxu0 0.0
        %998 = vmatprep.subr.mxu0 0.0
        %999 = vmatpush1.msra.mxu0 0.0
        %1000 = vmatprep.subr.mxu0 0.0
        %1001 = vmatpush1.msra.mxu0 0.0
        %1002 = vmatprep.mubr.f32.mxu0 0.0
        %1003 = vmatmul.mubr.f32.gmra.mrb[0].mxu0 %v936
        %v1004 = vpop.f32.mrb[0].mxu0
        %v1005 = vadd.f32 0.0, %v1004
        %v1006 = vpop.f32.mrb[0].mxu0
        %1007 = vdwg.mxu0
        %1009 = vset.pattern.permute.xlu0 0
        %1010 = vperm.xlu0 %1009, %v913
        %v1011 = vpop.permute.xlu0 %1010
        %v1012 = vlaneseq
        %v1013 = vshrl.u32 %v1012, 7
        %v1014 = vsub.s32 %v453, %v1013
        %v1015 = vrot.slane %v1011, %v1014
        %v1016 = vsel %vm541, %v1015, 0
        %1018 = vmatprep.subr.mxu0 0.0
        %1019 = vmatpush1.msra.mxu0 %v331
        %1020 = vmatprep.subr.mxu0 0.0
        %1021 = vmatpush1.msra.mxu0 0.0
        %1022 = vmatprep.subr.mxu0 0.0
        %1023 = vmatpush1.msra.mxu0 0.0
        %1024 = vmatprep.subr.mxu0 0.0
        %1025 = vmatpush1.msra.mxu0 0.0
        %1026 = vmatprep.subr.mxu0 0.0
        %1027 = vmatpush1.msra.mxu0 0.0
        %1028 = vmatprep.subr.mxu0 0.0
        %1029 = vmatpush1.msra.mxu0 0.0
        %1030 = vmatprep.subr.mxu0 0.0
        %1031 = vmatpush1.msra.mxu0 0.0
        %1032 = vmatprep.subr.mxu0 0.0
        %1033 = vmatpush1.msra.mxu0 0.0
        %1034 = vmatprep.subr.mxu0 0.0
        %1035 = vmatpush1.msra.mxu0 0.0
        %1036 = vmatprep.subr.mxu0 0.0
        %1037 = vmatpush1.msra.mxu0 0.0
        %1038 = vmatprep.subr.mxu0 0.0
        %1039 = vmatpush1.msra.mxu0 0.0
        %1040 = vmatprep.subr.mxu0 0.0
        %1041 = vmatpush1.msra.mxu0 0.0
        %1042 = vmatprep.subr.mxu0 0.0
        %1043 = vmatpush1.msra.mxu0 0.0
        %1044 = vmatprep.subr.mxu0 0.0
        %1045 = vmatpush1.msra.mxu0 0.0
        %1046 = vmatprep.subr.mxu0 0.0
        %1047 = vmatpush1.msra.mxu0 0.0
        %1048 = vmatprep.subr.mxu0 0.0
        %1049 = vmatpush1.msra.mxu0 0.0
        %1050 = vmatprep.subr.mxu0 0.0
        %1051 = vmatpush1.msra.mxu0 0.0
        %1052 = vmatprep.subr.mxu0 0.0
        %1053 = vmatpush1.msra.mxu0 0.0
        %1054 = vmatprep.subr.mxu0 0.0
        %1055 = vmatpush1.msra.mxu0 0.0
        %1056 = vmatprep.subr.mxu0 0.0
        %1057 = vmatpush1.msra.mxu0 0.0
        %1058 = vmatprep.subr.mxu0 0.0
        %1059 = vmatpush1.msra.mxu0 0.0
        %1060 = vmatprep.subr.mxu0 0.0
        %1061 = vmatpush1.msra.mxu0 0.0
        %1062 = vmatprep.subr.mxu0 0.0
        %1063 = vmatpush1.msra.mxu0 0.0
        %1064 = vmatprep.subr.mxu0 0.0
        %1065 = vmatpush1.msra.mxu0 0.0
        %1066 = vmatprep.subr.mxu0 0.0
        %1067 = vmatpush1.msra.mxu0 0.0
        %1068 = vmatprep.subr.mxu0 0.0
        %1069 = vmatpush1.msra.mxu0 0.0
        %1070 = vmatprep.subr.mxu0 0.0
        %1071 = vmatpush1.msra.mxu0 0.0
        %1072 = vmatprep.subr.mxu0 0.0
        %1073 = vmatpush1.msra.mxu0 0.0
        %1074 = vmatprep.subr.mxu0 0.0
        %1075 = vmatpush1.msra.mxu0 0.0
        %1076 = vmatprep.subr.mxu0 0.0
        %1077 = vmatpush1.msra.mxu0 0.0
        %1078 = vmatprep.subr.mxu0 0.0
        %1079 = vmatpush1.msra.mxu0 0.0
        %1080 = vmatprep.subr.mxu0 0.0
        %1081 = vmatpush1.msra.mxu0 0.0
        %1082 = vmatprep.mubr.f32.mxu0 0.0
        %1083 = vmatmul.mubr.f32.gmra.mrb[0].mxu0 %v1016
        %v1084 = vpop.f32.mrb[0].mxu0
        %v1085 = vadd.f32 0.0, %v1084
        %v1086 = vpop.f32.mrb[0].mxu0
        %1087 = vdwg.mxu0
        %1089 = vset.pattern.permute.xlu0 0
        %1090 = vperm.xlu0 %1089, %v914
        %v1091 = vpop.permute.xlu0 %1090
        %v1092 = vlaneseq
        %v1093 = vshrl.u32 %v1092, 7
        %v1094 = vsub.s32 %v453, %v1093
        %v1095 = vrot.slane %v1091, %v1094
        %v1096 = vsel %vm541, %v1095, 0
        %1098 = vmatprep.subr.mxu0 0.0
        %1099 = vmatpush1.msra.mxu0 %v332
        %1100 = vmatprep.subr.mxu0 0.0
        %1101 = vmatpush1.msra.mxu0 0.0
        %1102 = vmatprep.subr.mxu0 0.0
        %1103 = vmatpush1.msra.mxu0 0.0
        %1104 = vmatprep.subr.mxu0 0.0
        %1105 = vmatpush1.msra.mxu0 0.0
        %1106 = vmatprep.subr.mxu0 0.0
        %1107 = vmatpush1.msra.mxu0 0.0
        %1108 = vmatprep.subr.mxu0 0.0
        %1109 = vmatpush1.msra.mxu0 0.0
        %1110 = vmatprep.subr.mxu0 0.0
        %1111 = vmatpush1.msra.mxu0 0.0
        %1112 = vmatprep.subr.mxu0 0.0
        %1113 = vmatpush1.msra.mxu0 0.0
        %1114 = vmatprep.subr.mxu0 0.0
        %1115 = vmatpush1.msra.mxu0 0.0
        %1116 = vmatprep.subr.mxu0 0.0
        %1117 = vmatpush1.msra.mxu0 0.0
        %1118 = vmatprep.subr.mxu0 0.0
        %1119 = vmatpush1.msra.mxu0 0.0
        %1120 = vmatprep.subr.mxu0 0.0
        %1121 = vmatpush1.msra.mxu0 0.0
        %1122 = vmatprep.subr.mxu0 0.0
        %1123 = vmatpush1.msra.mxu0 0.0
        %1124 = vmatprep.subr.mxu0 0.0
        %1125 = vmatpush1.msra.mxu0 0.0
        %1126 = vmatprep.subr.mxu0 0.0
        %1127 = vmatpush1.msra.mxu0 0.0
        %1128 = vmatprep.subr.mxu0 0.0
        %1129 = vmatpush1.msra.mxu0 0.0
        %1130 = vmatprep.subr.mxu0 0.0
        %1131 = vmatpush1.msra.mxu0 0.0
        %1132 = vmatprep.subr.mxu0 0.0
        %1133 = vmatpush1.msra.mxu0 0.0
        %1134 = vmatprep.subr.mxu0 0.0
        %1135 = vmatpush1.msra.mxu0 0.0
        %1136 = vmatprep.subr.mxu0 0.0
        %1137 = vmatpush1.msra.mxu0 0.0
        %1138 = vmatprep.subr.mxu0 0.0
        %1139 = vmatpush1.msra.mxu0 0.0
        %1140 = vmatprep.subr.mxu0 0.0
        %1141 = vmatpush1.msra.mxu0 0.0
        %1142 = vmatprep.subr.mxu0 0.0
        %1143 = vmatpush1.msra.mxu0 0.0
        %1144 = vmatprep.subr.mxu0 0.0
        %1145 = vmatpush1.msra.mxu0 0.0
        %1146 = vmatprep.subr.mxu0 0.0
        %1147 = vmatpush1.msra.mxu0 0.0
        %1148 = vmatprep.subr.mxu0 0.0
        %1149 = vmatpush1.msra.mxu0 0.0
        %1150 = vmatprep.subr.mxu0 0.0
        %1151 = vmatpush1.msra.mxu0 0.0
        %1152 = vmatprep.subr.mxu0 0.0
        %1153 = vmatpush1.msra.mxu0 0.0
        %1154 = vmatprep.subr.mxu0 0.0
        %1155 = vmatpush1.msra.mxu0 0.0
        %1156 = vmatprep.subr.mxu0 0.0
        %1157 = vmatpush1.msra.mxu0 0.0
        %1158 = vmatprep.subr.mxu0 0.0
        %1159 = vmatpush1.msra.mxu0 0.0
        %1160 = vmatprep.subr.mxu0 0.0
        %1161 = vmatpush1.msra.mxu0 0.0
        %1162 = vmatprep.mubr.f32.mxu0 0.0
        %1163 = vmatmul.mubr.f32.gmra.mrb[0].mxu0 %v1096
        %v1164 = vpop.f32.mrb[0].mxu0
        %v1165 = vadd.f32 0.0, %v1164
        %v1166 = vpop.f32.mrb[0].mxu0
        %1167 = vdwg.mxu0
        %1169 = vset.pattern.permute.xlu0 0
        %1170 = vperm.xlu0 %1169, %v915
        %v1171 = vpop.permute.xlu0 %1170
        %v1172 = vlaneseq
        %v1173 = vshrl.u32 %v1172, 7
        %v1174 = vsub.s32 %v453, %v1173
        %v1175 = vrot.slane %v1171, %v1174
        %v1176 = vsel %vm541, %v1175, 0
        %1178 = vmatprep.subr.mxu0 0.0
        %1179 = vmatpush1.msra.mxu0 %v333
        %1180 = vmatprep.subr.mxu0 0.0
        %1181 = vmatpush1.msra.mxu0 0.0
        %1182 = vmatprep.subr.mxu0 0.0
        %1183 = vmatpush1.msra.mxu0 0.0
        %1184 = vmatprep.subr.mxu0 0.0
        %1185 = vmatpush1.msra.mxu0 0.0
        %1186 = vmatprep.subr.mxu0 0.0
        %1187 = vmatpush1.msra.mxu0 0.0
        %1188 = vmatprep.subr.mxu0 0.0
        %1189 = vmatpush1.msra.mxu0 0.0
        %1190 = vmatprep.subr.mxu0 0.0
        %1191 = vmatpush1.msra.mxu0 0.0
        %1192 = vmatprep.subr.mxu0 0.0
        %1193 = vmatpush1.msra.mxu0 0.0
        %1194 = vmatprep.subr.mxu0 0.0
        %1195 = vmatpush1.msra.mxu0 0.0
        %1196 = vmatprep.subr.mxu0 0.0
        %1197 = vmatpush1.msra.mxu0 0.0
        %1198 = vmatprep.subr.mxu0 0.0
        %1199 = vmatpush1.msra.mxu0 0.0
        %1200 = vmatprep.subr.mxu0 0.0
        %1201 = vmatpush1.msra.mxu0 0.0
        %1202 = vmatprep.subr.mxu0 0.0
        %1203 = vmatpush1.msra.mxu0 0.0
        %1204 = vmatprep.subr.mxu0 0.0
        %1205 = vmatpush1.msra.mxu0 0.0
        %1206 = vmatprep.subr.mxu0 0.0
        %1207 = vmatpush1.msra.mxu0 0.0
        %1208 = vmatprep.subr.mxu0 0.0
        %1209 = vmatpush1.msra.mxu0 0.0
        %1210 = vmatprep.subr.mxu0 0.0
        %1211 = vmatpush1.msra.mxu0 0.0
        %1212 = vmatprep.subr.mxu0 0.0
        %1213 = vmatpush1.msra.mxu0 0.0
        %1214 = vmatprep.subr.mxu0 0.0
        %1215 = vmatpush1.msra.mxu0 0.0
        %1216 = vmatprep.subr.mxu0 0.0
        %1217 = vmatpush1.msra.mxu0 0.0
        %1218 = vmatprep.subr.mxu0 0.0
        %1219 = vmatpush1.msra.mxu0 0.0
        %1220 = vmatprep.subr.mxu0 0.0
        %1221 = vmatpush1.msra.mxu0 0.0
        %1222 = vmatprep.subr.mxu0 0.0
        %1223 = vmatpush1.msra.mxu0 0.0
        %1224 = vmatprep.subr.mxu0 0.0
        %1225 = vmatpush1.msra.mxu0 0.0
        %1226 = vmatprep.subr.mxu0 0.0
        %1227 = vmatpush1.msra.mxu0 0.0
        %1228 = vmatprep.subr.mxu0 0.0
        %1229 = vmatpush1.msra.mxu0 0.0
        %1230 = vmatprep.subr.mxu0 0.0
        %1231 = vmatpush1.msra.mxu0 0.0
        %1232 = vmatprep.subr.mxu0 0.0
        %1233 = vmatpush1.msra.mxu0 0.0
        %1234 = vmatprep.subr.mxu0 0.0
        %1235 = vmatpush1.msra.mxu0 0.0
        %1236 = vmatprep.subr.mxu0 0.0
        %1237 = vmatpush1.msra.mxu0 0.0
        %1238 = vmatprep.subr.mxu0 0.0
        %1239 = vmatpush1.msra.mxu0 0.0
        %1240 = vmatprep.subr.mxu0 0.0
        %1241 = vmatpush1.msra.mxu0 0.0
        %1242 = vmatprep.mubr.f32.mxu0 0.0
        %1243 = vmatmul.mubr.f32.gmra.mrb[0].mxu0 %v1176
        %v1244 = vpop.f32.mrb[0].mxu0
        %v1245 = vadd.f32 0.0, %v1244
        %v1246 = vpop.f32.mrb[0].mxu0
        %1247 = vdwg.mxu0
        %1249 = vset.pattern.permute.xlu0 0
        %1250 = vperm.xlu0 %1249, %v916
        %v1251 = vpop.permute.xlu0 %1250
        %v1252 = vlaneseq
        %v1253 = vshrl.u32 %v1252, 7
        %v1254 = vsub.s32 %v453, %v1253
        %v1255 = vrot.slane %v1251, %v1254
        %v1256 = vsel %vm541, %v1255, 0
        %1258 = vmatprep.subr.mxu0 0.0
        %1259 = vmatpush1.msra.mxu0 %v334
        %1260 = vmatprep.subr.mxu0 0.0
        %1261 = vmatpush1.msra.mxu0 0.0
        %1262 = vmatprep.subr.mxu0 0.0
        %1263 = vmatpush1.msra.mxu0 0.0
        %1264 = vmatprep.subr.mxu0 0.0
        %1265 = vmatpush1.msra.mxu0 0.0
        %1266 = vmatprep.subr.mxu0 0.0
        %1267 = vmatpush1.msra.mxu0 0.0
        %1268 = vmatprep.subr.mxu0 0.0
        %1269 = vmatpush1.msra.mxu0 0.0
        %1270 = vmatprep.subr.mxu0 0.0
        %1271 = vmatpush1.msra.mxu0 0.0
        %1272 = vmatprep.subr.mxu0 0.0
        %1273 = vmatpush1.msra.mxu0 0.0
        %1274 = vmatprep.subr.mxu0 0.0
        %1275 = vmatpush1.msra.mxu0 0.0
        %1276 = vmatprep.subr.mxu0 0.0
        %1277 = vmatpush1.msra.mxu0 0.0
        %1278 = vmatprep.subr.mxu0 0.0
        %1279 = vmatpush1.msra.mxu0 0.0
        %1280 = vmatprep.subr.mxu0 0.0
        %1281 = vmatpush1.msra.mxu0 0.0
        %1282 = vmatprep.subr.mxu0 0.0
        %1283 = vmatpush1.msra.mxu0 0.0
        %1284 = vmatprep.subr.mxu0 0.0
        %1285 = vmatpush1.msra.mxu0 0.0
        %1286 = vmatprep.subr.mxu0 0.0
        %1287 = vmatpush1.msra.mxu0 0.0
        %1288 = vmatprep.subr.mxu0 0.0
        %1289 = vmatpush1.msra.mxu0 0.0
        %1290 = vmatprep.subr.mxu0 0.0
        %1291 = vmatpush1.msra.mxu0 0.0
        %1292 = vmatprep.subr.mxu0 0.0
        %1293 = vmatpush1.msra.mxu0 0.0
        %1294 = vmatprep.subr.mxu0 0.0
        %1295 = vmatpush1.msra.mxu0 0.0
        %1296 = vmatprep.subr.mxu0 0.0
        %1297 = vmatpush1.msra.mxu0 0.0
        %1298 = vmatprep.subr.mxu0 0.0
        %1299 = vmatpush1.msra.mxu0 0.0
        %1300 = vmatprep.subr.mxu0 0.0
        %1301 = vmatpush1.msra.mxu0 0.0
        %1302 = vmatprep.subr.mxu0 0.0
        %1303 = vmatpush1.msra.mxu0 0.0
        %1304 = vmatprep.subr.mxu0 0.0
        %1305 = vmatpush1.msra.mxu0 0.0
        %1306 = vmatprep.subr.mxu0 0.0
        %1307 = vmatpush1.msra.mxu0 0.0
        %1308 = vmatprep.subr.mxu0 0.0
        %1309 = vmatpush1.msra.mxu0 0.0
        %1310 = vmatprep.subr.mxu0 0.0
        %1311 = vmatpush1.msra.mxu0 0.0
        %1312 = vmatprep.subr.mxu0 0.0
        %1313 = vmatpush1.msra.mxu0 0.0
        %1314 = vmatprep.subr.mxu0 0.0
        %1315 = vmatpush1.msra.mxu0 0.0
        %1316 = vmatprep.subr.mxu0 0.0
        %1317 = vmatpush1.msra.mxu0 0.0
        %1318 = vmatprep.subr.mxu0 0.0
        %1319 = vmatpush1.msra.mxu0 0.0
        %1320 = vmatprep.subr.mxu0 0.0
        %1321 = vmatpush1.msra.mxu0 0.0
        %1322 = vmatprep.mubr.f32.mxu0 0.0
        %1323 = vmatmul.mubr.f32.gmra.mrb[0].mxu0 %v1256
        %v1324 = vpop.f32.mrb[0].mxu0
        %v1325 = vadd.f32 0.0, %v1324
        %v1326 = vpop.f32.mrb[0].mxu0
        %1327 = vdwg.mxu0
        %1329 = vset.pattern.permute.xlu0 0
        %1330 = vperm.xlu0 %1329, %v917
        %v1331 = vpop.permute.xlu0 %1330
        %v1332 = vlaneseq
        %v1333 = vshrl.u32 %v1332, 7
        %v1334 = vsub.s32 %v453, %v1333
        %v1335 = vrot.slane %v1331, %v1334
        %v1336 = vsel %vm541, %v1335, 0
        %1338 = vmatprep.subr.mxu0 0.0
        %1339 = vmatpush1.msra.mxu0 %v335
        %1340 = vmatprep.subr.mxu0 0.0
        %1341 = vmatpush1.msra.mxu0 0.0
        %1342 = vmatprep.subr.mxu0 0.0
        %1343 = vmatpush1.msra.mxu0 0.0
        %1344 = vmatprep.subr.mxu0 0.0
        %1345 = vmatpush1.msra.mxu0 0.0
        %1346 = vmatprep.subr.mxu0 0.0
        %1347 = vmatpush1.msra.mxu0 0.0
        %1348 = vmatprep.subr.mxu0 0.0
        %1349 = vmatpush1.msra.mxu0 0.0
        %1350 = vmatprep.subr.mxu0 0.0
        %1351 = vmatpush1.msra.mxu0 0.0
        %1352 = vmatprep.subr.mxu0 0.0
        %1353 = vmatpush1.msra.mxu0 0.0
        %1354 = vmatprep.subr.mxu0 0.0
        %1355 = vmatpush1.msra.mxu0 0.0
        %1356 = vmatprep.subr.mxu0 0.0
        %1357 = vmatpush1.msra.mxu0 0.0
        %1358 = vmatprep.subr.mxu0 0.0
        %1359 = vmatpush1.msra.mxu0 0.0
        %1360 = vmatprep.subr.mxu0 0.0
        %1361 = vmatpush1.msra.mxu0 0.0
        %1362 = vmatprep.subr.mxu0 0.0
        %1363 = vmatpush1.msra.mxu0 0.0
        %1364 = vmatprep.subr.mxu0 0.0
        %1365 = vmatpush1.msra.mxu0 0.0
        %1366 = vmatprep.subr.mxu0 0.0
        %1367 = vmatpush1.msra.mxu0 0.0
        %1368 = vmatprep.subr.mxu0 0.0
        %1369 = vmatpush1.msra.mxu0 0.0
        %1370 = vmatprep.subr.mxu0 0.0
        %1371 = vmatpush1.msra.mxu0 0.0
        %1372 = vmatprep.subr.mxu0 0.0
        %1373 = vmatpush1.msra.mxu0 0.0
        %1374 = vmatprep.subr.mxu0 0.0
        %1375 = vmatpush1.msra.mxu0 0.0
        %1376 = vmatprep.subr.mxu0 0.0
        %1377 = vmatpush1.msra.mxu0 0.0
        %1378 = vmatprep.subr.mxu0 0.0
        %1379 = vmatpush1.msra.mxu0 0.0
        %1380 = vmatprep.subr.mxu0 0.0
        %1381 = vmatpush1.msra.mxu0 0.0
        %1382 = vmatprep.subr.mxu0 0.0
        %1383 = vmatpush1.msra.mxu0 0.0
        %1384 = vmatprep.subr.mxu0 0.0
        %1385 = vmatpush1.msra.mxu0 0.0
        %1386 = vmatprep.subr.mxu0 0.0
        %1387 = vmatpush1.msra.mxu0 0.0
        %1388 = vmatprep.subr.mxu0 0.0
        %1389 = vmatpush1.msra.mxu0 0.0
        %1390 = vmatprep.subr.mxu0 0.0
        %1391 = vmatpush1.msra.mxu0 0.0
        %1392 = vmatprep.subr.mxu0 0.0
        %1393 = vmatpush1.msra.mxu0 0.0
        %1394 = vmatprep.subr.mxu0 0.0
        %1395 = vmatpush1.msra.mxu0 0.0
        %1396 = vmatprep.subr.mxu0 0.0
        %1397 = vmatpush1.msra.mxu0 0.0
        %1398 = vmatprep.subr.mxu0 0.0
        %1399 = vmatpush1.msra.mxu0 0.0
        %1400 = vmatprep.subr.mxu0 0.0
        %1401 = vmatpush1.msra.mxu0 0.0
        %1402 = vmatprep.mubr.f32.mxu0 0.0
        %1403 = vmatmul.mubr.f32.gmra.mrb[0].mxu0 %v1336
        %v1404 = vpop.f32.mrb[0].mxu0
        %v1405 = vadd.f32 0.0, %v1404
        %v1406 = vpop.f32.mrb[0].mxu0
        %1407 = vdwg.mxu0
        %1409 = vset.pattern.permute.xlu0 0
        %1410 = vperm.xlu0 %1409, %v918
        %v1411 = vpop.permute.xlu0 %1410
        %v1412 = vlaneseq
        %v1413 = vshrl.u32 %v1412, 7
        %v1414 = vsub.s32 %v453, %v1413
        %v1415 = vrot.slane %v1411, %v1414
        %v1416 = vsel %vm541, %v1415, 0
        %1418 = vmatprep.subr.mxu0 0.0
        %1419 = vmatpush1.msra.mxu0 %v336
        %1420 = vmatprep.subr.mxu0 0.0
        %1421 = vmatpush1.msra.mxu0 0.0
        %1422 = vmatprep.subr.mxu0 0.0
        %1423 = vmatpush1.msra.mxu0 0.0
        %1424 = vmatprep.subr.mxu0 0.0
        %1425 = vmatpush1.msra.mxu0 0.0
        %1426 = vmatprep.subr.mxu0 0.0
        %1427 = vmatpush1.msra.mxu0 0.0
        %1428 = vmatprep.subr.mxu0 0.0
        %1429 = vmatpush1.msra.mxu0 0.0
        %1430 = vmatprep.subr.mxu0 0.0
        %1431 = vmatpush1.msra.mxu0 0.0
        %1432 = vmatprep.subr.mxu0 0.0
        %1433 = vmatpush1.msra.mxu0 0.0
        %1434 = vmatprep.subr.mxu0 0.0
        %1435 = vmatpush1.msra.mxu0 0.0
        %1436 = vmatprep.subr.mxu0 0.0
        %1437 = vmatpush1.msra.mxu0 0.0
        %1438 = vmatprep.subr.mxu0 0.0
        %1439 = vmatpush1.msra.mxu0 0.0
        %1440 = vmatprep.subr.mxu0 0.0
        %1441 = vmatpush1.msra.mxu0 0.0
        %1442 = vmatprep.subr.mxu0 0.0
        %1443 = vmatpush1.msra.mxu0 0.0
        %1444 = vmatprep.subr.mxu0 0.0
        %1445 = vmatpush1.msra.mxu0 0.0
        %1446 = vmatprep.subr.mxu0 0.0
        %1447 = vmatpush1.msra.mxu0 0.0
        %1448 = vmatprep.subr.mxu0 0.0
        %1449 = vmatpush1.msra.mxu0 0.0
        %1450 = vmatprep.subr.mxu0 0.0
        %1451 = vmatpush1.msra.mxu0 0.0
        %1452 = vmatprep.subr.mxu0 0.0
        %1453 = vmatpush1.msra.mxu0 0.0
        %1454 = vmatprep.subr.mxu0 0.0
        %1455 = vmatpush1.msra.mxu0 0.0
        %1456 = vmatprep.subr.mxu0 0.0
        %1457 = vmatpush1.msra.mxu0 0.0
        %1458 = vmatprep.subr.mxu0 0.0
        %1459 = vmatpush1.msra.mxu0 0.0
        %1460 = vmatprep.subr.mxu0 0.0
        %1461 = vmatpush1.msra.mxu0 0.0
        %1462 = vmatprep.subr.mxu0 0.0
        %1463 = vmatpush1.msra.mxu0 0.0
        %1464 = vmatprep.subr.mxu0 0.0
        %1465 = vmatpush1.msra.mxu0 0.0
        %1466 = vmatprep.subr.mxu0 0.0
        %1467 = vmatpush1.msra.mxu0 0.0
        %1468 = vmatprep.subr.mxu0 0.0
        %1469 = vmatpush1.msra.mxu0 0.0
        %1470 = vmatprep.subr.mxu0 0.0
        %1471 = vmatpush1.msra.mxu0 0.0
        %1472 = vmatprep.subr.mxu0 0.0
        %1473 = vmatpush1.msra.mxu0 0.0
        %1474 = vmatprep.subr.mxu0 0.0
        %1475 = vmatpush1.msra.mxu0 0.0
        %1476 = vmatprep.subr.mxu0 0.0
        %1477 = vmatpush1.msra.mxu0 0.0
        %1478 = vmatprep.subr.mxu0 0.0
        %1479 = vmatpush1.msra.mxu0 0.0
        %1480 = vmatprep.subr.mxu0 0.0
        %1481 = vmatpush1.msra.mxu0 0.0
        %1482 = vmatprep.mubr.f32.mxu0 0.0
        %1483 = vmatmul.mubr.f32.gmra.mrb[0].mxu0 %v1416
        %v1484 = vpop.f32.mrb[0].mxu0
        %v1485 = vadd.f32 0.0, %v1484
        %v1486 = vpop.f32.mrb[0].mxu0
        %1487 = vdwg.mxu0
        %1489 = vset.pattern.permute.xlu0 0
        %1490 = vperm.xlu0 %1489, %v919
        %v1491 = vpop.permute.xlu0 %1490
        %v1492 = vlaneseq
        %v1493 = vshrl.u32 %v1492, 7
        %v1494 = vsub.s32 %v453, %v1493
        %v1495 = vrot.slane %v1491, %v1494
        %v1496 = vsel %vm541, %v1495, 0
        %1498 = vmatprep.subr.mxu0 0.0
        %1499 = vmatpush1.msra.mxu0 %v337
        %1500 = vmatprep.subr.mxu0 0.0
        %1501 = vmatpush1.msra.mxu0 0.0
        %1502 = vmatprep.subr.mxu0 0.0
        %1503 = vmatpush1.msra.mxu0 0.0
        %1504 = vmatprep.subr.mxu0 0.0
        %1505 = vmatpush1.msra.mxu0 0.0
        %1506 = vmatprep.subr.mxu0 0.0
        %1507 = vmatpush1.msra.mxu0 0.0
        %1508 = vmatprep.subr.mxu0 0.0
        %1509 = vmatpush1.msra.mxu0 0.0
        %1510 = vmatprep.subr.mxu0 0.0
        %1511 = vmatpush1.msra.mxu0 0.0
        %1512 = vmatprep.subr.mxu0 0.0
        %1513 = vmatpush1.msra.mxu0 0.0
        %1514 = vmatprep.subr.mxu0 0.0
        %1515 = vmatpush1.msra.mxu0 0.0
        %1516 = vmatprep.subr.mxu0 0.0
        %1517 = vmatpush1.msra.mxu0 0.0
        %1518 = vmatprep.subr.mxu0 0.0
        %1519 = vmatpush1.msra.mxu0 0.0
        %1520 = vmatprep.subr.mxu0 0.0
        %1521 = vmatpush1.msra.mxu0 0.0
        %1522 = vmatprep.subr.mxu0 0.0
        %1523 = vmatpush1.msra.mxu0 0.0
        %1524 = vmatprep.subr.mxu0 0.0
        %1525 = vmatpush1.msra.mxu0 0.0
        %1526 = vmatprep.subr.mxu0 0.0
        %1527 = vmatpush1.msra.mxu0 0.0
        %1528 = vmatprep.subr.mxu0 0.0
        %1529 = vmatpush1.msra.mxu0 0.0
        %1530 = vmatprep.subr.mxu0 0.0
        %1531 = vmatpush1.msra.mxu0 0.0
        %1532 = vmatprep.subr.mxu0 0.0
        %1533 = vmatpush1.msra.mxu0 0.0
        %1534 = vmatprep.subr.mxu0 0.0
        %1535 = vmatpush1.msra.mxu0 0.0
        %1536 = vmatprep.subr.mxu0 0.0
        %1537 = vmatpush1.msra.mxu0 0.0
        %1538 = vmatprep.subr.mxu0 0.0
        %1539 = vmatpush1.msra.mxu0 0.0
        %1540 = vmatprep.subr.mxu0 0.0
        %1541 = vmatpush1.msra.mxu0 0.0
        %1542 = vmatprep.subr.mxu0 0.0
        %1543 = vmatpush1.msra.mxu0 0.0
        %1544 = vmatprep.subr.mxu0 0.0
        %1545 = vmatpush1.msra.mxu0 0.0
        %1546 = vmatprep.subr.mxu0 0.0
        %1547 = vmatpush1.msra.mxu0 0.0
        %1548 = vmatprep.subr.mxu0 0.0
        %1549 = vmatpush1.msra.mxu0 0.0
        %1550 = vmatprep.subr.mxu0 0.0
        %1551 = vmatpush1.msra.mxu0 0.0
        %1552 = vmatprep.subr.mxu0 0.0
        %1553 = vmatpush1.msra.mxu0 0.0
        %1554 = vmatprep.subr.mxu0 0.0
        %1555 = vmatpush1.msra.mxu0 0.0
        %1556 = vmatprep.subr.mxu0 0.0
        %1557 = vmatpush1.msra.mxu0 0.0
        %1558 = vmatprep.subr.mxu0 0.0
        %1559 = vmatpush1.msra.mxu0 0.0
        %1560 = vmatprep.subr.mxu0 0.0
        %1561 = vmatpush1.msra.mxu0 0.0
        %1562 = vmatprep.mubr.f32.mxu0 0.0
        %1563 = vmatmul.mubr.f32.gmra.mrb[0].mxu0 %v1496
        %v1564 = vpop.f32.mrb[0].mxu0
        %v1565 = vadd.f32 0.0, %v1564
        %v1566 = vpop.f32.mrb[0].mxu0
        %1567 = vdwg.mxu0
        %1569 = vset.pattern.permute.xlu0 0
        %1570 = vperm.xlu0 %1569, %v920
        %v1571 = vpop.permute.xlu0 %1570
        %v1572 = vlaneseq
        %v1573 = vshrl.u32 %v1572, 7
        %v1574 = vsub.s32 %v453, %v1573
        %v1575 = vrot.slane %v1571, %v1574
        %v1576 = vsel %vm541, %v1575, 0
        %1578 = vmatprep.subr.mxu0 0.0
        %1579 = vmatpush1.msra.mxu0 %v338
        %1580 = vmatprep.subr.mxu0 0.0
        %1581 = vmatpush1.msra.mxu0 0.0
        %1582 = vmatprep.subr.mxu0 0.0
        %1583 = vmatpush1.msra.mxu0 0.0
        %1584 = vmatprep.subr.mxu0 0.0
        %1585 = vmatpush1.msra.mxu0 0.0
        %1586 = vmatprep.subr.mxu0 0.0
        %1587 = vmatpush1.msra.mxu0 0.0
        %1588 = vmatprep.subr.mxu0 0.0
        %1589 = vmatpush1.msra.mxu0 0.0
        %1590 = vmatprep.subr.mxu0 0.0
        %1591 = vmatpush1.msra.mxu0 0.0
        %1592 = vmatprep.subr.mxu0 0.0
        %1593 = vmatpush1.msra.mxu0 0.0
        %1594 = vmatprep.subr.mxu0 0.0
        %1595 = vmatpush1.msra.mxu0 0.0
        %1596 = vmatprep.subr.mxu0 0.0
        %1597 = vmatpush1.msra.mxu0 0.0
        %1598 = vmatprep.subr.mxu0 0.0
        %1599 = vmatpush1.msra.mxu0 0.0
        %1600 = vmatprep.subr.mxu0 0.0
        %1601 = vmatpush1.msra.mxu0 0.0
        %1602 = vmatprep.subr.mxu0 0.0
        %1603 = vmatpush1.msra.mxu0 0.0
        %1604 = vmatprep.subr.mxu0 0.0
        %1605 = vmatpush1.msra.mxu0 0.0
        %1606 = vmatprep.subr.mxu0 0.0
        %1607 = vmatpush1.msra.mxu0 0.0
        %1608 = vmatprep.subr.mxu0 0.0
        %1609 = vmatpush1.msra.mxu0 0.0
        %1610 = vmatprep.subr.mxu0 0.0
        %1611 = vmatpush1.msra.mxu0 0.0
        %1612 = vmatprep.subr.mxu0 0.0
        %1613 = vmatpush1.msra.mxu0 0.0
        %1614 = vmatprep.subr.mxu0 0.0
        %1615 = vmatpush1.msra.mxu0 0.0
        %1616 = vmatprep.subr.mxu0 0.0
        %1617 = vmatpush1.msra.mxu0 0.0
        %1618 = vmatprep.subr.mxu0 0.0
        %1619 = vmatpush1.msra.mxu0 0.0
        %1620 = vmatprep.subr.mxu0 0.0
        %1621 = vmatpush1.msra.mxu0 0.0
        %1622 = vmatprep.subr.mxu0 0.0
        %1623 = vmatpush1.msra.mxu0 0.0
        %1624 = vmatprep.subr.mxu0 0.0
        %1625 = vmatpush1.msra.mxu0 0.0
        %1626 = vmatprep.subr.mxu0 0.0
        %1627 = vmatpush1.msra.mxu0 0.0
        %1628 = vmatprep.subr.mxu0 0.0
        %1629 = vmatpush1.msra.mxu0 0.0
        %1630 = vmatprep.subr.mxu0 0.0
        %1631 = vmatpush1.msra.mxu0 0.0
        %1632 = vmatprep.subr.mxu0 0.0
        %1633 = vmatpush1.msra.mxu0 0.0
        %1634 = vmatprep.subr.mxu0 0.0
        %1635 = vmatpush1.msra.mxu0 0.0
        %1636 = vmatprep.subr.mxu0 0.0
        %1637 = vmatpush1.msra.mxu0 0.0
        %1638 = vmatprep.subr.mxu0 0.0
        %1639 = vmatpush1.msra.mxu0 0.0
        %1640 = vmatprep.subr.mxu0 0.0
        %1641 = vmatpush1.msra.mxu0 0.0
        %1642 = vmatprep.mubr.f32.mxu0 0.0
        %1643 = vmatmul.mubr.f32.gmra.mrb[0].mxu0 %v1576
        %v1644 = vpop.f32.mrb[0].mxu0
        %v1645 = vadd.f32 0.0, %v1644
        %v1646 = vpop.f32.mrb[0].mxu0
        %1647 = vdwg.mxu0
        %1649 = vset.pattern.permute.xlu0 0
        %1650 = vperm.xlu0 %1649, %v921
        %v1651 = vpop.permute.xlu0 %1650
        %v1652 = vlaneseq
        %v1653 = vshrl.u32 %v1652, 7
        %v1654 = vsub.s32 %v453, %v1653
        %v1655 = vrot.slane %v1651, %v1654
        %v1656 = vsel %vm541, %v1655, 0
        %1658 = vmatprep.subr.mxu0 0.0
        %1659 = vmatpush1.msra.mxu0 %v339
        %1660 = vmatprep.subr.mxu0 0.0
        %1661 = vmatpush1.msra.mxu0 0.0
        %1662 = vmatprep.subr.mxu0 0.0
        %1663 = vmatpush1.msra.mxu0 0.0
        %1664 = vmatprep.subr.mxu0 0.0
        %1665 = vmatpush1.msra.mxu0 0.0
        %1666 = vmatprep.subr.mxu0 0.0
        %1667 = vmatpush1.msra.mxu0 0.0
        %1668 = vmatprep.subr.mxu0 0.0
        %1669 = vmatpush1.msra.mxu0 0.0
        %1670 = vmatprep.subr.mxu0 0.0
        %1671 = vmatpush1.msra.mxu0 0.0
        %1672 = vmatprep.subr.mxu0 0.0
        %1673 = vmatpush1.msra.mxu0 0.0
        %1674 = vmatprep.subr.mxu0 0.0
        %1675 = vmatpush1.msra.mxu0 0.0
        %1676 = vmatprep.subr.mxu0 0.0
        %1677 = vmatpush1.msra.mxu0 0.0
        %1678 = vmatprep.subr.mxu0 0.0
        %1679 = vmatpush1.msra.mxu0 0.0
        %1680 = vmatprep.subr.mxu0 0.0
        %1681 = vmatpush1.msra.mxu0 0.0
        %1682 = vmatprep.subr.mxu0 0.0
        %1683 = vmatpush1.msra.mxu0 0.0
        %1684 = vmatprep.subr.mxu0 0.0
        %1685 = vmatpush1.msra.mxu0 0.0
        %1686 = vmatprep.subr.mxu0 0.0
        %1687 = vmatpush1.msra.mxu0 0.0
        %1688 = vmatprep.subr.mxu0 0.0
        %1689 = vmatpush1.msra.mxu0 0.0
        %1690 = vmatprep.subr.mxu0 0.0
        %1691 = vmatpush1.msra.mxu0 0.0
        %1692 = vmatprep.subr.mxu0 0.0
        %1693 = vmatpush1.msra.mxu0 0.0
        %1694 = vmatprep.subr.mxu0 0.0
        %1695 = vmatpush1.msra.mxu0 0.0
        %1696 = vmatprep.subr.mxu0 0.0
        %1697 = vmatpush1.msra.mxu0 0.0
        %1698 = vmatprep.subr.mxu0 0.0
        %1699 = vmatpush1.msra.mxu0 0.0
        %1700 = vmatprep.subr.mxu0 0.0
        %1701 = vmatpush1.msra.mxu0 0.0
        %1702 = vmatprep.subr.mxu0 0.0
        %1703 = vmatpush1.msra.mxu0 0.0
        %1704 = vmatprep.subr.mxu0 0.0
        %1705 = vmatpush1.msra.mxu0 0.0
        %1706 = vmatprep.subr.mxu0 0.0
        %1707 = vmatpush1.msra.mxu0 0.0
        %1708 = vmatprep.subr.mxu0 0.0
        %1709 = vmatpush1.msra.mxu0 0.0
        %1710 = vmatprep.subr.mxu0 0.0
        %1711 = vmatpush1.msra.mxu0 0.0
        %1712 = vmatprep.subr.mxu0 0.0
        %1713 = vmatpush1.msra.mxu0 0.0
        %1714 = vmatprep.subr.mxu0 0.0
        %1715 = vmatpush1.msra.mxu0 0.0
        %1716 = vmatprep.subr.mxu0 0.0
        %1717 = vmatpush1.msra.mxu0 0.0
        %1718 = vmatprep.subr.mxu0 0.0
        %1719 = vmatpush1.msra.mxu0 0.0
        %1720 = vmatprep.subr.mxu0 0.0
        %1721 = vmatpush1.msra.mxu0 0.0
        %1722 = vmatprep.mubr.f32.mxu0 0.0
        %1723 = vmatmul.mubr.f32.gmra.mrb[0].mxu0 %v1656
        %v1724 = vpop.f32.mrb[0].mxu0
        %v1725 = vadd.f32 0.0, %v1724
        %v1726 = vpop.f32.mrb[0].mxu0
        %1727 = vdwg.mxu0
        %1729 = vset.pattern.permute.xlu0 0
        %1730 = vperm.xlu0 %1729, %v922
        %v1731 = vpop.permute.xlu0 %1730
        %v1732 = vlaneseq
        %v1733 = vshrl.u32 %v1732, 7
        %v1734 = vsub.s32 %v453, %v1733
        %v1735 = vrot.slane %v1731, %v1734
        %v1736 = vsel %vm541, %v1735, 0
        %1738 = vmatprep.subr.mxu0 0.0
        %1739 = vmatpush1.msra.mxu0 %v340
        %1740 = vmatprep.subr.mxu0 0.0
        %1741 = vmatpush1.msra.mxu0 0.0
        %1742 = vmatprep.subr.mxu0 0.0
        %1743 = vmatpush1.msra.mxu0 0.0
        %1744 = vmatprep.subr.mxu0 0.0
        %1745 = vmatpush1.msra.mxu0 0.0
        %1746 = vmatprep.subr.mxu0 0.0
        %1747 = vmatpush1.msra.mxu0 0.0
        %1748 = vmatprep.subr.mxu0 0.0
        %1749 = vmatpush1.msra.mxu0 0.0
        %1750 = vmatprep.subr.mxu0 0.0
        %1751 = vmatpush1.msra.mxu0 0.0
        %1752 = vmatprep.subr.mxu0 0.0
        %1753 = vmatpush1.msra.mxu0 0.0
        %1754 = vmatprep.subr.mxu0 0.0
        %1755 = vmatpush1.msra.mxu0 0.0
        %1756 = vmatprep.subr.mxu0 0.0
        %1757 = vmatpush1.msra.mxu0 0.0
        %1758 = vmatprep.subr.mxu0 0.0
        %1759 = vmatpush1.msra.mxu0 0.0
        %1760 = vmatprep.subr.mxu0 0.0
        %1761 = vmatpush1.msra.mxu0 0.0
        %1762 = vmatprep.subr.mxu0 0.0
        %1763 = vmatpush1.msra.mxu0 0.0
        %1764 = vmatprep.subr.mxu0 0.0
        %1765 = vmatpush1.msra.mxu0 0.0
        %1766 = vmatprep.subr.mxu0 0.0
        %1767 = vmatpush1.msra.mxu0 0.0
        %1768 = vmatprep.subr.mxu0 0.0
        %1769 = vmatpush1.msra.mxu0 0.0
        %1770 = vmatprep.subr.mxu0 0.0
        %1771 = vmatpush1.msra.mxu0 0.0
        %1772 = vmatprep.subr.mxu0 0.0
        %1773 = vmatpush1.msra.mxu0 0.0
        %1774 = vmatprep.subr.mxu0 0.0
        %1775 = vmatpush1.msra.mxu0 0.0
        %1776 = vmatprep.subr.mxu0 0.0
        %1777 = vmatpush1.msra.mxu0 0.0
        %1778 = vmatprep.subr.mxu0 0.0
        %1779 = vmatpush1.msra.mxu0 0.0
        %1780 = vmatprep.subr.mxu0 0.0
        %1781 = vmatpush1.msra.mxu0 0.0
        %1782 = vmatprep.subr.mxu0 0.0
        %1783 = vmatpush1.msra.mxu0 0.0
        %1784 = vmatprep.subr.mxu0 0.0
        %1785 = vmatpush1.msra.mxu0 0.0
        %1786 = vmatprep.subr.mxu0 0.0
        %1787 = vmatpush1.msra.mxu0 0.0
        %1788 = vmatprep.subr.mxu0 0.0
        %1789 = vmatpush1.msra.mxu0 0.0
        %1790 = vmatprep.subr.mxu0 0.0
        %1791 = vmatpush1.msra.mxu0 0.0
        %1792 = vmatprep.subr.mxu0 0.0
        %1793 = vmatpush1.msra.mxu0 0.0
        %1794 = vmatprep.subr.mxu0 0.0
        %1795 = vmatpush1.msra.mxu0 0.0
        %1796 = vmatprep.subr.mxu0 0.0
        %1797 = vmatpush1.msra.mxu0 0.0
        %1798 = vmatprep.subr.mxu0 0.0
        %1799 = vmatpush1.msra.mxu0 0.0
        %1800 = vmatprep.subr.mxu0 0.0
        %1801 = vmatpush1.msra.mxu0 0.0
        %1802 = vmatprep.mubr.f32.mxu0 0.0
        %1803 = vmatmul.mubr.f32.gmra.mrb[0].mxu0 %v1736
        %v1804 = vpop.f32.mrb[0].mxu0
        %v1805 = vadd.f32 0.0, %v1804
        %v1806 = vpop.f32.mrb[0].mxu0
        %1807 = vdwg.mxu0
        %1809 = vset.pattern.permute.xlu0 0
        %1810 = vperm.xlu0 %1809, %v923
        %v1811 = vpop.permute.xlu0 %1810
        %v1812 = vlaneseq
        %v1813 = vshrl.u32 %v1812, 7
        %v1814 = vsub.s32 %v453, %v1813
        %v1815 = vrot.slane %v1811, %v1814
        %v1816 = vsel %vm541, %v1815, 0
        %1818 = vmatprep.subr.mxu0 0.0
        %1819 = vmatpush1.msra.mxu0 %v341
        %1820 = vmatprep.subr.mxu0 0.0
        %1821 = vmatpush1.msra.mxu0 0.0
        %1822 = vmatprep.subr.mxu0 0.0
        %1823 = vmatpush1.msra.mxu0 0.0
        %1824 = vmatprep.subr.mxu0 0.0
        %1825 = vmatpush1.msra.mxu0 0.0
        %1826 = vmatprep.subr.mxu0 0.0
        %1827 = vmatpush1.msra.mxu0 0.0
        %1828 = vmatprep.subr.mxu0 0.0
        %1829 = vmatpush1.msra.mxu0 0.0
        %1830 = vmatprep.subr.mxu0 0.0
        %1831 = vmatpush1.msra.mxu0 0.0
        %1832 = vmatprep.subr.mxu0 0.0
        %1833 = vmatpush1.msra.mxu0 0.0
        %1834 = vmatprep.subr.mxu0 0.0
        %1835 = vmatpush1.msra.mxu0 0.0
        %1836 = vmatprep.subr.mxu0 0.0
        %1837 = vmatpush1.msra.mxu0 0.0
        %1838 = vmatprep.subr.mxu0 0.0
        %1839 = vmatpush1.msra.mxu0 0.0
        %1840 = vmatprep.subr.mxu0 0.0
        %1841 = vmatpush1.msra.mxu0 0.0
        %1842 = vmatprep.subr.mxu0 0.0
        %1843 = vmatpush1.msra.mxu0 0.0
        %1844 = vmatprep.subr.mxu0 0.0
        %1845 = vmatpush1.msra.mxu0 0.0
        %1846 = vmatprep.subr.mxu0 0.0
        %1847 = vmatpush1.msra.mxu0 0.0
        %1848 = vmatprep.subr.mxu0 0.0
        %1849 = vmatpush1.msra.mxu0 0.0
        %1850 = vmatprep.subr.mxu0 0.0
        %1851 = vmatpush1.msra.mxu0 0.0
        %1852 = vmatprep.subr.mxu0 0.0
        %1853 = vmatpush1.msra.mxu0 0.0
        %1854 = vmatprep.subr.mxu0 0.0
        %1855 = vmatpush1.msra.mxu0 0.0
        %1856 = vmatprep.subr.mxu0 0.0
        %1857 = vmatpush1.msra.mxu0 0.0
        %1858 = vmatprep.subr.mxu0 0.0
        %1859 = vmatpush1.msra.mxu0 0.0
        %1860 = vmatprep.subr.mxu0 0.0
        %1861 = vmatpush1.msra.mxu0 0.0
        %1862 = vmatprep.subr.mxu0 0.0
        %1863 = vmatpush1.msra.mxu0 0.0
        %1864 = vmatprep.subr.mxu0 0.0
        %1865 = vmatpush1.msra.mxu0 0.0
        %1866 = vmatprep.subr.mxu0 0.0
        %1867 = vmatpush1.msra.mxu0 0.0
        %1868 = vmatprep.subr.mxu0 0.0
        %1869 = vmatpush1.msra.mxu0 0.0
        %1870 = vmatprep.subr.mxu0 0.0
        %1871 = vmatpush1.msra.mxu0 0.0
        %1872 = vmatprep.subr.mxu0 0.0
        %1873 = vmatpush1.msra.mxu0 0.0
        %1874 = vmatprep.subr.mxu0 0.0
        %1875 = vmatpush1.msra.mxu0 0.0
        %1876 = vmatprep.subr.mxu0 0.0
        %1877 = vmatpush1.msra.mxu0 0.0
        %1878 = vmatprep.subr.mxu0 0.0
        %1879 = vmatpush1.msra.mxu0 0.0
        %1880 = vmatprep.subr.mxu0 0.0
        %1881 = vmatpush1.msra.mxu0 0.0
        %1882 = vmatprep.mubr.f32.mxu0 0.0
        %1883 = vmatmul.mubr.f32.gmra.mrb[0].mxu0 %v1816
        %v1884 = vpop.f32.mrb[0].mxu0
        %v1885 = vadd.f32 0.0, %v1884
        %v1886 = vpop.f32.mrb[0].mxu0
        %1887 = vdwg.mxu0
        %1889 = vset.pattern.permute.xlu0 0
        %1890 = vperm.xlu0 %1889, %v924
        %v1891 = vpop.permute.xlu0 %1890
        %v1892 = vlaneseq
        %v1893 = vshrl.u32 %v1892, 7
        %v1894 = vsub.s32 %v453, %v1893
        %v1895 = vrot.slane %v1891, %v1894
        %v1896 = vsel %vm541, %v1895, 0
        %1898 = vmatprep.subr.mxu0 0.0
        %1899 = vmatpush1.msra.mxu0 %v342
        %1900 = vmatprep.subr.mxu0 0.0
        %1901 = vmatpush1.msra.mxu0 0.0
        %1902 = vmatprep.subr.mxu0 0.0
        %1903 = vmatpush1.msra.mxu0 0.0
        %1904 = vmatprep.subr.mxu0 0.0
        %1905 = vmatpush1.msra.mxu0 0.0
        %1906 = vmatprep.subr.mxu0 0.0
        %1907 = vmatpush1.msra.mxu0 0.0
        %1908 = vmatprep.subr.mxu0 0.0
        %1909 = vmatpush1.msra.mxu0 0.0
        %1910 = vmatprep.subr.mxu0 0.0
        %1911 = vmatpush1.msra.mxu0 0.0
        %1912 = vmatprep.subr.mxu0 0.0
        %1913 = vmatpush1.msra.mxu0 0.0
        %1914 = vmatprep.subr.mxu0 0.0
        %1915 = vmatpush1.msra.mxu0 0.0
        %1916 = vmatprep.subr.mxu0 0.0
        %1917 = vmatpush1.msra.mxu0 0.0
        %1918 = vmatprep.subr.mxu0 0.0
        %1919 = vmatpush1.msra.mxu0 0.0
        %1920 = vmatprep.subr.mxu0 0.0
        %1921 = vmatpush1.msra.mxu0 0.0
        %1922 = vmatprep.subr.mxu0 0.0
        %1923 = vmatpush1.msra.mxu0 0.0
        %1924 = vmatprep.subr.mxu0 0.0
        %1925 = vmatpush1.msra.mxu0 0.0
        %1926 = vmatprep.subr.mxu0 0.0
        %1927 = vmatpush1.msra.mxu0 0.0
        %1928 = vmatprep.subr.mxu0 0.0
        %1929 = vmatpush1.msra.mxu0 0.0
        %1930 = vmatprep.subr.mxu0 0.0
        %1931 = vmatpush1.msra.mxu0 0.0
        %1932 = vmatprep.subr.mxu0 0.0
        %1933 = vmatpush1.msra.mxu0 0.0
        %1934 = vmatprep.subr.mxu0 0.0
        %1935 = vmatpush1.msra.mxu0 0.0
        %1936 = vmatprep.subr.mxu0 0.0
        %1937 = vmatpush1.msra.mxu0 0.0
        %1938 = vmatprep.subr.mxu0 0.0
        %1939 = vmatpush1.msra.mxu0 0.0
        %1940 = vmatprep.subr.mxu0 0.0
        %1941 = vmatpush1.msra.mxu0 0.0
        %1942 = vmatprep.subr.mxu0 0.0
        %1943 = vmatpush1.msra.mxu0 0.0
        %1944 = vmatprep.subr.mxu0 0.0
        %1945 = vmatpush1.msra.mxu0 0.0
        %1946 = vmatprep.subr.mxu0 0.0
        %1947 = vmatpush1.msra.mxu0 0.0
        %1948 = vmatprep.subr.mxu0 0.0
        %1949 = vmatpush1.msra.mxu0 0.0
        %1950 = vmatprep.subr.mxu0 0.0
        %1951 = vmatpush1.msra.mxu0 0.0
        %1952 = vmatprep.subr.mxu0 0.0
        %1953 = vmatpush1.msra.mxu0 0.0
        %1954 = vmatprep.subr.mxu0 0.0
        %1955 = vmatpush1.msra.mxu0 0.0
        %1956 = vmatprep.subr.mxu0 0.0
        %1957 = vmatpush1.msra.mxu0 0.0
        %1958 = vmatprep.subr.mxu0 0.0
        %1959 = vmatpush1.msra.mxu0 0.0
        %1960 = vmatprep.subr.mxu0 0.0
        %1961 = vmatpush1.msra.mxu0 0.0
        %1962 = vmatprep.mubr.f32.mxu0 0.0
        %1963 = vmatmul.mubr.f32.gmra.mrb[0].mxu0 %v1896
        %v1964 = vpop.f32.mrb[0].mxu0
        %v1965 = vadd.f32 0.0, %v1964
        %v1966 = vpop.f32.mrb[0].mxu0
        %1967 = vdwg.mxu0
        %1969 = vset.pattern.permute.xlu0 0
        %1970 = vperm.xlu0 %1969, %v925
        %v1971 = vpop.permute.xlu0 %1970
        %v1972 = vlaneseq
        %v1973 = vshrl.u32 %v1972, 7
        %v1974 = vsub.s32 %v453, %v1973
        %v1975 = vrot.slane %v1971, %v1974
        %v1976 = vsel %vm541, %v1975, 0
        %1978 = vmatprep.subr.mxu0 0.0
        %1979 = vmatpush1.msra.mxu0 %v343
        %1980 = vmatprep.subr.mxu0 0.0
        %1981 = vmatpush1.msra.mxu0 0.0
        %1982 = vmatprep.subr.mxu0 0.0
        %1983 = vmatpush1.msra.mxu0 0.0
        %1984 = vmatprep.subr.mxu0 0.0
        %1985 = vmatpush1.msra.mxu0 0.0
        %1986 = vmatprep.subr.mxu0 0.0
        %1987 = vmatpush1.msra.mxu0 0.0
        %1988 = vmatprep.subr.mxu0 0.0
        %1989 = vmatpush1.msra.mxu0 0.0
        %1990 = vmatprep.subr.mxu0 0.0
        %1991 = vmatpush1.msra.mxu0 0.0
        %1992 = vmatprep.subr.mxu0 0.0
        %1993 = vmatpush1.msra.mxu0 0.0
        %1994 = vmatprep.subr.mxu0 0.0
        %1995 = vmatpush1.msra.mxu0 0.0
        %1996 = vmatprep.subr.mxu0 0.0
        %1997 = vmatpush1.msra.mxu0 0.0
        %1998 = vmatprep.subr.mxu0 0.0
        %1999 = vmatpush1.msra.mxu0 0.0
        %2000 = vmatprep.subr.mxu0 0.0
        %2001 = vmatpush1.msra.mxu0 0.0
        %2002 = vmatprep.subr.mxu0 0.0
        %2003 = vmatpush1.msra.mxu0 0.0
        %2004 = vmatprep.subr.mxu0 0.0
        %2005 = vmatpush1.msra.mxu0 0.0
        %2006 = vmatprep.subr.mxu0 0.0
        %2007 = vmatpush1.msra.mxu0 0.0
        %2008 = vmatprep.subr.mxu0 0.0
        %2009 = vmatpush1.msra.mxu0 0.0
        %2010 = vmatprep.subr.mxu0 0.0
        %2011 = vmatpush1.msra.mxu0 0.0
        %2012 = vmatprep.subr.mxu0 0.0
        %2013 = vmatpush1.msra.mxu0 0.0
        %2014 = vmatprep.subr.mxu0 0.0
        %2015 = vmatpush1.msra.mxu0 0.0
        %2016 = vmatprep.subr.mxu0 0.0
        %2017 = vmatpush1.msra.mxu0 0.0
        %2018 = vmatprep.subr.mxu0 0.0
        %2019 = vmatpush1.msra.mxu0 0.0
        %2020 = vmatprep.subr.mxu0 0.0
        %2021 = vmatpush1.msra.mxu0 0.0
        %2022 = vmatprep.subr.mxu0 0.0
        %2023 = vmatpush1.msra.mxu0 0.0
        %2024 = vmatprep.subr.mxu0 0.0
        %2025 = vmatpush1.msra.mxu0 0.0
        %2026 = vmatprep.subr.mxu0 0.0
        %2027 = vmatpush1.msra.mxu0 0.0
        %2028 = vmatprep.subr.mxu0 0.0
        %2029 = vmatpush1.msra.mxu0 0.0
        %2030 = vmatprep.subr.mxu0 0.0
        %2031 = vmatpush1.msra.mxu0 0.0
        %2032 = vmatprep.subr.mxu0 0.0
        %2033 = vmatpush1.msra.mxu0 0.0
        %2034 = vmatprep.subr.mxu0 0.0
        %2035 = vmatpush1.msra.mxu0 0.0
        %2036 = vmatprep.subr.mxu0 0.0
        %2037 = vmatpush1.msra.mxu0 0.0
        %2038 = vmatprep.subr.mxu0 0.0
        %2039 = vmatpush1.msra.mxu0 0.0
        %2040 = vmatprep.subr.mxu0 0.0
        %2041 = vmatpush1.msra.mxu0 0.0
        %2042 = vmatprep.mubr.f32.mxu0 0.0
        %2043 = vmatmul.mubr.f32.gmra.mrb[0].mxu0 %v1976
        %v2044 = vpop.f32.mrb[0].mxu0
        %v2045 = vadd.f32 0.0, %v2044
        %v2046 = vpop.f32.mrb[0].mxu0
        %2047 = vdwg.mxu0
        %2049 = vset.pattern.permute.xlu0 0
        %2050 = vperm.xlu0 %2049, %v926
        %v2051 = vpop.permute.xlu0 %2050
        %v2052 = vlaneseq
        %v2053 = vshrl.u32 %v2052, 7
        %v2054 = vsub.s32 %v453, %v2053
        %v2055 = vrot.slane %v2051, %v2054
        %v2056 = vsel %vm541, %v2055, 0
        %2058 = vmatprep.subr.mxu0 0.0
        %2059 = vmatpush1.msra.mxu0 %v344
        %2060 = vmatprep.subr.mxu0 0.0
        %2061 = vmatpush1.msra.mxu0 0.0
        %2062 = vmatprep.subr.mxu0 0.0
        %2063 = vmatpush1.msra.mxu0 0.0
        %2064 = vmatprep.subr.mxu0 0.0
        %2065 = vmatpush1.msra.mxu0 0.0
        %2066 = vmatprep.subr.mxu0 0.0
        %2067 = vmatpush1.msra.mxu0 0.0
        %2068 = vmatprep.subr.mxu0 0.0
        %2069 = vmatpush1.msra.mxu0 0.0
        %2070 = vmatprep.subr.mxu0 0.0
        %2071 = vmatpush1.msra.mxu0 0.0
        %2072 = vmatprep.subr.mxu0 0.0
        %2073 = vmatpush1.msra.mxu0 0.0
        %2074 = vmatprep.subr.mxu0 0.0
        %2075 = vmatpush1.msra.mxu0 0.0
        %2076 = vmatprep.subr.mxu0 0.0
        %2077 = vmatpush1.msra.mxu0 0.0
        %2078 = vmatprep.subr.mxu0 0.0
        %2079 = vmatpush1.msra.mxu0 0.0
        %2080 = vmatprep.subr.mxu0 0.0
        %2081 = vmatpush1.msra.mxu0 0.0
        %2082 = vmatprep.subr.mxu0 0.0
        %2083 = vmatpush1.msra.mxu0 0.0
        %2084 = vmatprep.subr.mxu0 0.0
        %2085 = vmatpush1.msra.mxu0 0.0
        %2086 = vmatprep.subr.mxu0 0.0
        %2087 = vmatpush1.msra.mxu0 0.0
        %2088 = vmatprep.subr.mxu0 0.0
        %2089 = vmatpush1.msra.mxu0 0.0
        %2090 = vmatprep.subr.mxu0 0.0
        %2091 = vmatpush1.msra.mxu0 0.0
        %2092 = vmatprep.subr.mxu0 0.0
        %2093 = vmatpush1.msra.mxu0 0.0
        %2094 = vmatprep.subr.mxu0 0.0
        %2095 = vmatpush1.msra.mxu0 0.0
        %2096 = vmatprep.subr.mxu0 0.0
        %2097 = vmatpush1.msra.mxu0 0.0
        %2098 = vmatprep.subr.mxu0 0.0
        %2099 = vmatpush1.msra.mxu0 0.0
        %2100 = vmatprep.subr.mxu0 0.0
        %2101 = vmatpush1.msra.mxu0 0.0
        %2102 = vmatprep.subr.mxu0 0.0
        %2103 = vmatpush1.msra.mxu0 0.0
        %2104 = vmatprep.subr.mxu0 0.0
        %2105 = vmatpush1.msra.mxu0 0.0
        %2106 = vmatprep.subr.mxu0 0.0
        %2107 = vmatpush1.msra.mxu0 0.0
        %2108 = vmatprep.subr.mxu0 0.0
        %2109 = vmatpush1.msra.mxu0 0.0
        %2110 = vmatprep.subr.mxu0 0.0
        %2111 = vmatpush1.msra.mxu0 0.0
        %2112 = vmatprep.subr.mxu0 0.0
        %2113 = vmatpush1.msra.mxu0 0.0
        %2114 = vmatprep.subr.mxu0 0.0
        %2115 = vmatpush1.msra.mxu0 0.0
        %2116 = vmatprep.subr.mxu0 0.0
        %2117 = vmatpush1.msra.mxu0 0.0
        %2118 = vmatprep.subr.mxu0 0.0
        %2119 = vmatpush1.msra.mxu0 0.0
        %2120 = vmatprep.subr.mxu0 0.0
        %2121 = vmatpush1.msra.mxu0 0.0
        %2122 = vmatprep.mubr.f32.mxu0 0.0
        %2123 = vmatmul.mubr.f32.gmra.mrb[0].mxu0 %v2056
        %v2124 = vpop.f32.mrb[0].mxu0
        %v2125 = vadd.f32 0.0, %v2124
        %v2126 = vpop.f32.mrb[0].mxu0
        %2127 = vdwg.mxu0
        %2129 = vset.pattern.permute.xlu0 0
        %2130 = vperm.xlu0 %2129, %v927
        %v2131 = vpop.permute.xlu0 %2130
        %v2132 = vlaneseq
        %v2133 = vshrl.u32 %v2132, 7
        %v2134 = vsub.s32 %v453, %v2133
        %v2135 = vrot.slane %v2131, %v2134
        %v2136 = vsel %vm541, %v2135, 0
        %2138 = vmatprep.subr.mxu0 0.0
        %2139 = vmatpush1.msra.mxu0 %v345
        %2140 = vmatprep.subr.mxu0 0.0
        %2141 = vmatpush1.msra.mxu0 0.0
        %2142 = vmatprep.subr.mxu0 0.0
        %2143 = vmatpush1.msra.mxu0 0.0
        %2144 = vmatprep.subr.mxu0 0.0
        %2145 = vmatpush1.msra.mxu0 0.0
        %2146 = vmatprep.subr.mxu0 0.0
        %2147 = vmatpush1.msra.mxu0 0.0
        %2148 = vmatprep.subr.mxu0 0.0
        %2149 = vmatpush1.msra.mxu0 0.0
        %2150 = vmatprep.subr.mxu0 0.0
        %2151 = vmatpush1.msra.mxu0 0.0
        %2152 = vmatprep.subr.mxu0 0.0
        %2153 = vmatpush1.msra.mxu0 0.0
        %2154 = vmatprep.subr.mxu0 0.0
        %2155 = vmatpush1.msra.mxu0 0.0
        %2156 = vmatprep.subr.mxu0 0.0
        %2157 = vmatpush1.msra.mxu0 0.0
        %2158 = vmatprep.subr.mxu0 0.0
        %2159 = vmatpush1.msra.mxu0 0.0
        %2160 = vmatprep.subr.mxu0 0.0
        %2161 = vmatpush1.msra.mxu0 0.0
        %2162 = vmatprep.subr.mxu0 0.0
        %2163 = vmatpush1.msra.mxu0 0.0
        %2164 = vmatprep.subr.mxu0 0.0
        %2165 = vmatpush1.msra.mxu0 0.0
        %2166 = vmatprep.subr.mxu0 0.0
        %2167 = vmatpush1.msra.mxu0 0.0
        %2168 = vmatprep.subr.mxu0 0.0
        %2169 = vmatpush1.msra.mxu0 0.0
        %2170 = vmatprep.subr.mxu0 0.0
        %2171 = vmatpush1.msra.mxu0 0.0
        %2172 = vmatprep.subr.mxu0 0.0
        %2173 = vmatpush1.msra.mxu0 0.0
        %2174 = vmatprep.subr.mxu0 0.0
        %2175 = vmatpush1.msra.mxu0 0.0
        %2176 = vmatprep.subr.mxu0 0.0
        %2177 = vmatpush1.msra.mxu0 0.0
        %2178 = vmatprep.subr.mxu0 0.0
        %2179 = vmatpush1.msra.mxu0 0.0
        %2180 = vmatprep.subr.mxu0 0.0
        %2181 = vmatpush1.msra.mxu0 0.0
        %2182 = vmatprep.subr.mxu0 0.0
        %2183 = vmatpush1.msra.mxu0 0.0
        %2184 = vmatprep.subr.mxu0 0.0
        %2185 = vmatpush1.msra.mxu0 0.0
        %2186 = vmatprep.subr.mxu0 0.0
        %2187 = vmatpush1.msra.mxu0 0.0
        %2188 = vmatprep.subr.mxu0 0.0
        %2189 = vmatpush1.msra.mxu0 0.0
        %2190 = vmatprep.subr.mxu0 0.0
        %2191 = vmatpush1.msra.mxu0 0.0
        %2192 = vmatprep.subr.mxu0 0.0
        %2193 = vmatpush1.msra.mxu0 0.0
        %2194 = vmatprep.subr.mxu0 0.0
        %2195 = vmatpush1.msra.mxu0 0.0
        %2196 = vmatprep.subr.mxu0 0.0
        %2197 = vmatpush1.msra.mxu0 0.0
        %2198 = vmatprep.subr.mxu0 0.0
        %2199 = vmatpush1.msra.mxu0 0.0
        %2200 = vmatprep.subr.mxu0 0.0
        %2201 = vmatpush1.msra.mxu0 0.0
        %2202 = vmatprep.mubr.f32.mxu0 0.0
        %2203 = vmatmul.mubr.f32.gmra.mrb[0].mxu0 %v2136
        %v2204 = vpop.f32.mrb[0].mxu0
        %v2205 = vadd.f32 0.0, %v2204
        %v2206 = vpop.f32.mrb[0].mxu0
        %2207 = vdwg.mxu0
        %v2208 = vld [vmem:[#allocation6] sm:$0xff]
        %v2209 = vld [vmem:[#allocation6 + $0x8] sm:$0xff]
        %v2210 = vld [vmem:[#allocation6 + $0x10] sm:$0xff]
        %v2211 = vld [vmem:[#allocation6 + $0x18] sm:$0xff]
        %v2212 = vld [vmem:[%s4] sm:$0x1]
        %v2213 = vlaneseq
        %v2214 = vshrl.u32 %v2213, 7
        %v2215 = vsub.s32 0, %v2214
        %v2216 = vrot.slane %v2212, %v2215
        %v2233 = vrot.slane %v1085, 7
        %v2234 = vsel %vm518, %v2233, %v1005
        %v2235 = vrot.slane %v1165, 6
        %v2236 = vsel %vm520, %v2235, %v2234
        %v2237 = vrot.slane %v1245, 5
        %v2238 = vsel %vm522, %v2237, %v2236
        %v2239 = vrot.slane %v1325, 4
        %v2240 = vsel %vm524, %v2239, %v2238
        %v2241 = vrot.slane %v1405, 3
        %v2242 = vsel %vm526, %v2241, %v2240
        %v2243 = vrot.slane %v1485, 2
        %v2244 = vsel %vm528, %v2243, %v2242
        %v2245 = vrot.slane %v1565, 1
        %v2246 = vsel %vm530, %v2245, %v2244
        %v2247 = vrot.slane %v1725, 7
        %v2248 = vsel %vm518, %v2247, %v1645
        %v2249 = vrot.slane %v1805, 6
        %v2250 = vsel %vm520, %v2249, %v2248
        %v2251 = vrot.slane %v1885, 5
        %v2252 = vsel %vm522, %v2251, %v2250
        %v2253 = vrot.slane %v1965, 4
        %v2254 = vsel %vm524, %v2253, %v2252
        %v2255 = vrot.slane %v2045, 3
        %v2256 = vsel %vm526, %v2255, %v2254
        %v2257 = vrot.slane %v2125, 2
        %v2258 = vsel %vm528, %v2257, %v2256
        %v2259 = vrot.slane %v2205, 1
        %v2260 = vsel %vm530, %v2259, %v2258
        %v2261 = vsel %vm369, %v2246, 0
        %v2263 = vsel %vm369, %v2260, 0
        %2265 = vmatprep.subr.mxu0 0.0
        %2266 = vmatpush1.msra.mxu0 %v2208
        %2267 = vmatprep.subr.mxu0 0.0
        %2268 = vmatpush1.msra.mxu0 %v2209
        %2269 = vmatprep.subr.mxu0 0.0
        %2270 = vmatpush1.msra.mxu0 %v2210
        %2271 = vmatprep.subr.mxu0 0.0
        %2272 = vmatpush1.msra.mxu0 %v2211
        %2273 = vmatprep.subr.mxu0 0.0
        %2274 = vmatpush1.msra.mxu0 0.0
        %2275 = vmatprep.subr.mxu0 0.0
        %2276 = vmatpush1.msra.mxu0 0.0
        %2277 = vmatprep.subr.mxu0 0.0
        %2278 = vmatpush1.msra.mxu0 0.0
        %2279 = vmatprep.subr.mxu0 0.0
        %2280 = vmatpush1.msra.mxu0 0.0
        %2281 = vmatprep.subr.mxu0 0.0
        %2282 = vmatpush1.msra.mxu0 0.0
        %2283 = vmatprep.subr.mxu0 0.0
        %2284 = vmatpush1.msra.mxu0 0.0
        %2285 = vmatprep.subr.mxu0 0.0
        %2286 = vmatpush1.msra.mxu0 0.0
        %2287 = vmatprep.subr.mxu0 0.0
        %2288 = vmatpush1.msra.mxu0 0.0
        %2289 = vmatprep.subr.mxu0 0.0
        %2290 = vmatpush1.msra.mxu0 0.0
        %2291 = vmatprep.subr.mxu0 0.0
        %2292 = vmatpush1.msra.mxu0 0.0
        %2293 = vmatprep.subr.mxu0 0.0
        %2294 = vmatpush1.msra.mxu0 0.0
        %2295 = vmatprep.subr.mxu0 0.0
        %2296 = vmatpush1.msra.mxu0 0.0
        %2297 = vmatprep.subr.mxu0 0.0
        %2298 = vmatpush1.msra.mxu0 0.0
        %2299 = vmatprep.subr.mxu0 0.0
        %2300 = vmatpush1.msra.mxu0 0.0
        %2301 = vmatprep.subr.mxu0 0.0
        %2302 = vmatpush1.msra.mxu0 0.0
        %2303 = vmatprep.subr.mxu0 0.0
        %2304 = vmatpush1.msra.mxu0 0.0
        %2305 = vmatprep.subr.mxu0 0.0
        %2306 = vmatpush1.msra.mxu0 0.0
        %2307 = vmatprep.subr.mxu0 0.0
        %2308 = vmatpush1.msra.mxu0 0.0
        %2309 = vmatprep.subr.mxu0 0.0
        %2310 = vmatpush1.msra.mxu0 0.0
        %2311 = vmatprep.subr.mxu0 0.0
        %2312 = vmatpush1.msra.mxu0 0.0
        %2313 = vmatprep.subr.mxu0 0.0
        %2314 = vmatpush1.msra.mxu0 0.0
        %2315 = vmatprep.subr.mxu0 0.0
        %2316 = vmatpush1.msra.mxu0 0.0
        %2317 = vmatprep.subr.mxu0 0.0
        %2318 = vmatpush1.msra.mxu0 0.0
        %2319 = vmatprep.subr.mxu0 0.0
        %2320 = vmatpush1.msra.mxu0 0.0
        %2321 = vmatprep.subr.mxu0 0.0
        %2322 = vmatpush1.msra.mxu0 0.0
        %2323 = vmatprep.subr.mxu0 0.0
        %2324 = vmatpush1.msra.mxu0 0.0
        %2325 = vmatprep.subr.mxu0 0.0
        %2326 = vmatpush1.msra.mxu0 0.0
        %2327 = vmatprep.subr.mxu0 0.0
        %2328 = vmatpush1.msra.mxu0 0.0
        %2329 = vmatprep.mubr.f32.mxu0 0.0
        %2330 = vmatmul.mubr.f32.gmra.mrb[0].mxu0 %v2261
        %v2331 = vpop.f32.mrb[0].mxu0
        %v2332 = vadd.f32 %v2216, %v2331
        %v2333 = vpop.f32.mrb[0].mxu0
        %2334 = vmatprep.mubr.f32.mxu0 0.0
        %2335 = vmatmul.mubr.f32.gmra.mrb[0].mxu0 %v2263
        %v2336 = vpop.f32.mrb[0].mxu0
        %v2337 = vadd.f32 %v2216, %v2336
        %v2338 = vpop.f32.mrb[0].mxu0
        %2339 = vdwg.mxu0
        %v2340 = vsel %vm369, %v2332, 0.0
        %v2341 = vrot.slane %v2340, 4
        %v2342 = vadd.f32 %v2340, %v2341
        %v2343 = vrot.slane %v2342, 2
        %v2344 = vadd.f32 %v2342, %v2343
        %v2345 = vrot.slane %v2344, 1
        %v2346 = vadd.f32 %v2344, %v2345
        %v2347 = vsel %vm369, %v2337, 0.0
        %v2348 = vrot.slane %v2347, 4
        %v2349 = vadd.f32 %v2347, %v2348
        %v2350 = vrot.slane %v2349, 2
        %v2351 = vadd.f32 %v2349, %v2350
        %v2352 = vrot.slane %v2351, 1
        %v2353 = vadd.f32 %v2351, %v2352
        %v2354 = vrcp.pop 8.0
        %v2355 = vmul.f32 %v2346, %v2354
        %v2356 = vmul.f32 %v2353, %v2354
        %v2357 = vsub.f32 %v2332, %v2355
        %v2358 = vsub.f32 %v2337, %v2356
        %v2359 = vmul.f32 %v2357, %v2357
        %v2360 = vmul.f32 %v2358, %v2358
        %v2361 = vsel %vm369, %v2359, 0.0
        %v2362 = vrot.slane %v2361, 4
        %v2363 = vadd.f32 %v2361, %v2362
        %v2364 = vrot.slane %v2363, 2
        %v2365 = vadd.f32 %v2363, %v2364
        %v2366 = vrot.slane %v2365, 1
        %v2367 = vadd.f32 %v2365, %v2366
        %v2368 = vsel %vm369, %v2360, 0.0
        %v2369 = vrot.slane %v2368, 4
        %v2370 = vadd.f32 %v2368, %v2369
        %v2371 = vrot.slane %v2370, 2
        %v2372 = vadd.f32 %v2370, %v2371
        %v2373 = vrot.slane %v2372, 1
        %v2374 = vadd.f32 %v2372, %v2373
        %v2375 = vmul.f32 %v2367, %v2354
        %v2376 = vmul.f32 %v2374, %v2354
        %v2377 = vadd.f32 %v2375, 1e-05
        %v2378 = vadd.f32 %v2376, 1e-05
        %v2379 = vrsqrt.pop %v2377
        %v2380 = vrsqrt.pop %v2378
        %v2381 = vmul.f32 %v2357, %v2379
        %v2382 = vmul.f32 %v2358, %v2380
        %v2383 = vld [vmem:[%s4 + $0x1] sm:$0x1]
        %v2384 = vlaneseq
        %v2385 = vshrl.u32 %v2384, 7
        %v2386 = vsub.s32 0, %v2385
        %v2387 = vrot.slane %v2383, %v2386
        %v2388 = vmul.f32 %v2381, %v2387
        %v2389 = vmul.f32 %v2382, %v2387
        %v2390 = vld [vmem:[%s4 + $0x2] sm:$0x1]
        %v2391 = vlaneseq
        %v2392 = vshrl.u32 %v2391, 7
        %v2393 = vsub.s32 0, %v2392
        %v2394 = vrot.slane %v2390, %v2393
        %v2395 = vadd.f32 %v2388, %v2394
        %v2396 = vadd.f32 %v2389, %v2394
        %v2397 = vmax.f32 %v2395, 0.0
        %v2398 = vmax.f32 %v2396, 0.0
        %v2399 = vld [vmem:[#allocation8] sm:$0xff]
        %v2400 = vld [vmem:[#allocation8 + $0x8] sm:$0xff]
        %v2401 = vld [vmem:[#allocation8 + $0x10] sm:$0xff]
        %v2402 = vld [vmem:[#allocation8 + $0x18] sm:$0xff]
        %v2403 = vld [vmem:[%s6] sm:$0x1]
        %v2405 = vlaneseq
        %v2406 = vshrl.u32 %v2405, 7
        %v2407 = vsub.s32 0, %v2406
        %v2408 = vrot.slane %v2403, %v2407
        %v2411 = vsel %vm369, %v2397, 0
        %v2414 = vsel %vm369, %v2398, 0
        %2416 = vmatprep.subr.mxu0 0.0
        %2417 = vmatpush1.msra.mxu0 %v2399
        %2418 = vmatprep.subr.mxu0 0.0
        %2419 = vmatpush1.msra.mxu0 %v2400
        %2420 = vmatprep.subr.mxu0 0.0
        %2421 = vmatpush1.msra.mxu0 %v2401
        %2422 = vmatprep.subr.mxu0 0.0
        %2423 = vmatpush1.msra.mxu0 %v2402
        %2424 = vmatprep.subr.mxu0 0.0
        %2425 = vmatpush1.msra.mxu0 0.0
        %2426 = vmatprep.subr.mxu0 0.0
        %2427 = vmatpush1.msra.mxu0 0.0
        %2428 = vmatprep.subr.mxu0 0.0
        %2429 = vmatpush1.msra.mxu0 0.0
        %2430 = vmatprep.subr.mxu0 0.0
        %2431 = vmatpush1.msra.mxu0 0.0
        %2432 = vmatprep.subr.mxu0 0.0
        %2433 = vmatpush1.msra.mxu0 0.0
        %2434 = vmatprep.subr.mxu0 0.0
        %2435 = vmatpush1.msra.mxu0 0.0
        %2436 = vmatprep.subr.mxu0 0.0
        %2437 = vmatpush1.msra.mxu0 0.0
        %2438 = vmatprep.subr.mxu0 0.0
        %2439 = vmatpush1.msra.mxu0 0.0
        %2440 = vmatprep.subr.mxu0 0.0
        %2441 = vmatpush1.msra.mxu0 0.0
        %2442 = vmatprep.subr.mxu0 0.0
        %2443 = vmatpush1.msra.mxu0 0.0
        %2444 = vmatprep.subr.mxu0 0.0
        %2445 = vmatpush1.msra.mxu0 0.0
        %2446 = vmatprep.subr.mxu0 0.0
        %2447 = vmatpush1.msra.mxu0 0.0
        %2448 = vmatprep.subr.mxu0 0.0
        %2449 = vmatpush1.msra.mxu0 0.0
        %2450 = vmatprep.subr.mxu0 0.0
        %2451 = vmatpush1.msra.mxu0 0.0
        %2452 = vmatprep.subr.mxu0 0.0
        %2453 = vmatpush1.msra.mxu0 0.0
        %2454 = vmatprep.subr.mxu0 0.0
        %2455 = vmatpush1.msra.mxu0 0.0
        %2456 = vmatprep.subr.mxu0 0.0
        %2457 = vmatpush1.msra.mxu0 0.0
        %2458 = vmatprep.subr.mxu0 0.0
        %2459 = vmatpush1.msra.mxu0 0.0
        %2460 = vmatprep.subr.mxu0 0.0
        %2461 = vmatpush1.msra.mxu0 0.0
        %2462 = vmatprep.subr.mxu0 0.0
        %2463 = vmatpush1.msra.mxu0 0.0
        %2464 = vmatprep.subr.mxu0 0.0
        %2465 = vmatpush1.msra.mxu0 0.0
        %2466 = vmatprep.subr.mxu0 0.0
        %2467 = vmatpush1.msra.mxu0 0.0
        %2468 = vmatprep.subr.mxu0 0.0
        %2469 = vmatpush1.msra.mxu0 0.0
        %2470 = vmatprep.subr.mxu0 0.0
        %2471 = vmatpush1.msra.mxu0 0.0
        %2472 = vmatprep.subr.mxu0 0.0
        %2473 = vmatpush1.msra.mxu0 0.0
        %2474 = vmatprep.subr.mxu0 0.0
        %2475 = vmatpush1.msra.mxu0 0.0
        %2476 = vmatprep.subr.mxu0 0.0
        %2477 = vmatpush1.msra.mxu0 0.0
        %2478 = vmatprep.subr.mxu0 0.0
        %2479 = vmatpush1.msra.mxu0 0.0
        %2480 = vmatprep.mubr.f32.mxu0 0.0
        %2481 = vmatmul.mubr.f32.gmra.mrb[0].mxu0 %v2411
        %v2482 = vpop.f32.mrb[0].mxu0
        %v2483 = vadd.f32 %v2408, %v2482
        %v2484 = vpop.f32.mrb[0].mxu0
        %2485 = vmatprep.mubr.f32.mxu0 0.0
        %2486 = vmatmul.mubr.f32.gmra.mrb[0].mxu0 %v2414
        %v2487 = vpop.f32.mrb[0].mxu0
        %v2488 = vadd.f32 %v2408, %v2487
        %v2489 = vpop.f32.mrb[0].mxu0
        %2490 = vdwg.mxu0
        %2491 = vst [vmem:[%s327] sm:$0xff] %v2483
        %2492 = vst [vmem:[%s327 + $0x8] sm:$0xff] %v2488
        %s2493 = sand.u32 %s186, 1
        %s2494 = scalar_lea.sflag [#allocation5], %s2493
        %s2495 = sand.u32 %s186, 1
        %s2496 = smul.addr %s2495, 16
        %s2497 = scalar_lea.vmem [#allocation9], %s2496
        // Predicated region
        $region61: #{tpu_custom_call.1} parent=47 // pred_check
          %p2498 = pneg %p196
        $region62: #{tpu_custom_call.1} parent=47 // pred_check_branch
          %2500 = sbr.rel (%p2498) target = $region64
        $region63: #{tpu_custom_call.1} parent=47 // pred_region
          %s2501 = smul.u32 2, %s26
          %s2503 = ssub.s32 256, 256
          %2504 = vsyncadd %s2494, %s2503
          %s2505 = smul.addr %s2501, 128
          %s2506 = scalar_lea.hbm %s7, %s2505
          %s2507 = sshll.u32 %s2497, 4
          %s2508 = int_to_ptr.vmem [resolvable:$true] %s2507
          %2513 = dma.vmem_to_hbm [thread:$0]  %s2508, 256, %s2506, %s2494, 128, 128, 8
        $region64: #{tpu_custom_call.1} parent=47 // pred_fallthru
          _
      $region48: #{tpu_custom_call.1} parent=5 // pred_fallthru
        _
      %p2514 = scmp.le.s32.totalorder 2, %s21
      // Predicated region
      $region65: #{tpu_custom_call.1} parent=5 // pred_check
        %p2515 = pneg %p2514
      $region66: #{tpu_custom_call.1} parent=5 // pred_check_branch
        %2517 = sbr.rel (%p2515) target = $region68
      $region67: #{tpu_custom_call.1} parent=5 // pred_region
        %s2518 = ssub.s32 %s21, 2
        // Predicated region
        $region69: #{tpu_custom_call.1} parent=67 // pred_check
          %p2519 = pneg %p202
        $region70: #{tpu_custom_call.1} parent=67 // pred_check_branch
          %2521 = sbr.rel (%p2519) target = $region72
        $region71: #{tpu_custom_call.1} parent=67 // pred_region
          %s2522 = sand.u32 %s187, 1
          %s2523 = scalar_lea.sflag [#allocation5], %s2522
          %s2524 = sand.u32 %s187, 1
          %s2525 = smul.addr %s2524, 16
          %s2526 = scalar_lea.vmem [#allocation9], %s2525
          %2527 = dma.done %s2523, 256
        $region72: #{tpu_custom_call.1} parent=67 // pred_fallthru
          _
      $region68: #{tpu_custom_call.1} parent=5 // pred_fallthru
        _
    $region6: #{tpu_custom_call.1} parent=1 // loop_footer
      %s25 = sadd.s32 1, %s21
    $region7: #{tpu_custom_call.1} parent=1 // loop_footer_branch
      %20 = sbr.rel target = $region3
    $region8: #{tpu_custom_call.1} parent=1 // loop_exit
      _
    %2528 = vsyncpa [#allocation4], 1
    %s2529 = scalar_lea.sflag [#allocation4], 1
    %2530 = vsyncpa %s2529, 1
    %2531 = vsyncpa [#allocation7], 1
    %2532 = vsyncpa [#allocation5], 1
    %s2533 = scalar_lea.sflag [#allocation5], 1
    %2534 = vsyncpa %s2533, 1

</llo_original>
